<compile_context>
chip_gen: v5e
topology: v5e:2x2
jax: 0.10.0
libtpu: 0.0.40
codegen_flags: <defaults>
</compile_context>

<pallas_src>
import functools

import jax
import jax.numpy as jnp
from jax.experimental import pallas as pl
from jax.experimental.pallas import tpu as pltpu


def _bigru_kernel(x_ref, wih_ref, bih_ref, whh_ref, bhn_ref,
                  out_ref,
                  gi_ref, outb_ref,
                  *, seq_len, batch, hidden):
    T, B, H = seq_len, batch, hidden
    f32, bf16 = jnp.float32, jnp.bfloat16

    # ---- Phase 1: hoisted input projection — both directions, all gates, one matmul.
    # Column layout of gi / gh / whh / wih: [r_f | r_b | z_f | z_b | n_f | n_b].
    gi_ref[...] = (jnp.dot(x_ref[...], wih_ref[...], preferred_element_type=f32)
                   + bih_ref[...])

    # Loop-invariant hoist: b_hn pre-broadcast to (B, 2H) ONCE (not per unrolled step).
    bhn = jnp.broadcast_to(bhn_ref[...], (B, 2 * H))        # (B, 2H) f32

    h0 = jnp.zeros((B, 2 * H), f32)                         # [h_f | h_b]

    def body(t, h):
        row_f = t * B                                       # fwd time t; bwd time T-1-t
        # Single block-diagonal recurrent matmul for both directions / all gates.
        gh = jnp.dot(h.astype(bf16), whh_ref[...],
                     preferred_element_type=f32)            # (B, 6H)
        g = gi_ref[pl.ds(row_f, B), :]                      # (B, 6H), one contiguous load
        # One EUP push covers r & z of both directions.
        rz = jax.nn.sigmoid(g[:, :4 * H] + gh[:, :4 * H])   # (B, 4H)
        r = rz[:, :2 * H]                                   # [r_f | r_b]
        z = rz[:, 2 * H:]                                   # [z_f | z_b]
        # One EUP push covers n of both directions (b_hn stays inside the r*() term).
        n = jnp.tanh(g[:, 4 * H:] + r * (gh[:, 4 * H:] + bhn))
        h_new = n + z * (h - n)                             # == (1 - z) * n + z * h
        # Forward output for time t goes straight to the output half (lane offset 0).
        out_ref[pl.ds(row_f, B), 0:H] = h_new[:, :H]
        # Backward output belongs to time T-1-t; stash at lane offset 0, shift in bulk later.
        row_b = (T - 1 - t) * B
        outb_ref[pl.ds(row_b, B), :] = h_new[:, H:]
        return h_new

    jax.lax.fori_loop(0, T, body, h0, unroll=min(T, 8))

    # ---- Epilogue: one bulk lane-shifted copy of the backward half.
    out_ref[:, H:2 * H] = outb_ref[...]


def bigru_encode(x, params):
    """x: (T, B, I) float32. Returns (T, B, 2*H) float32 == nn.GRU(..., bidirectional=True)(x)[0]."""
    T, B, I = x.shape
    H = params["whh_f"].shape[0]
    bf16, f32 = jnp.bfloat16, jnp.float32

    def gate(w, g):                                         # gate column block g of [r|z|n]
        return w[:, g * H:(g + 1) * H]

    zI = jnp.zeros((I, H), f32)
    zH = jnp.zeros((H, H), f32)

    # Block-structured input-projection weight (2I, 6H): rows 0:I forward, I:2I backward;
    # columns [r_f | r_b | z_f | z_b | n_f | n_b].
    wih_blk = jnp.concatenate([
        jnp.concatenate([gate(params["wih_f"], 0), zI,
                         gate(params["wih_f"], 1), zI,
                         gate(params["wih_f"], 2), zI], axis=1),
        jnp.concatenate([zI, gate(params["wih_b"], 0),
                         zI, gate(params["wih_b"], 1),
                         zI, gate(params["wih_b"], 2)], axis=1),
    ], axis=0).astype(bf16)                                 # (2I, 6H)

    # Block-diagonal recurrent weight (2H, 6H): rows 0:H act on h_f, rows H:2H on h_b.
    whh_blk = jnp.concatenate([
        jnp.concatenate([gate(params["whh_f"], 0), zH,
                         gate(params["whh_f"], 1), zH,
                         gate(params["whh_f"], 2), zH], axis=1),
        jnp.concatenate([zH, gate(params["whh_b"], 0),
                         zH, gate(params["whh_b"], 1),
                         zH, gate(params["whh_b"], 2)], axis=1),
    ], axis=0).astype(bf16)                                 # (2H, 6H)

    # Phase-1 bias: b_ih for all gates, with the r/z halves of b_hh folded in (legal for
    # r/z; the n-gate b_hn must stay inside the r*(...) term and is passed separately).
    bih_blk = jnp.concatenate([
        gate(params["bih_f"], 0) + gate(params["bhh_f"], 0),
        gate(params["bih_b"], 0) + gate(params["bhh_b"], 0),
        gate(params["bih_f"], 1) + gate(params["bhh_f"], 1),
        gate(params["bih_b"], 1) + gate(params["bhh_b"], 1),
        gate(params["bih_f"], 2),
        gate(params["bih_b"], 2),
    ], axis=1).astype(f32)                                  # (1, 6H)
    bhn = jnp.concatenate([gate(params["bhh_f"], 2),
                           gate(params["bhh_b"], 2)], axis=1).astype(f32)   # (1, 2H)

    # [x | x reversed in time]: lets every recurrence step read one contiguous gi row-block.
    x2d = x.reshape(T * B, I)
    x2d_rev = x[::-1].reshape(T * B, I)
    x_blk = jnp.concatenate([x2d, x2d_rev], axis=1).astype(bf16)            # (T*B, 2I)

    # Explicit scoped-VMEM limit sized to residency (defaults: 16 MiB v5e, 32 MiB v6e/v7x).
    resident = (x_blk.size * 2 + wih_blk.size * 2 + whh_blk.size * 2
                + bih_blk.size * 4 + bhn.size * 4
                + T * B * 2 * H * 4            # output
                + T * B * 6 * H * 4            # fused gi scratch
                + T * B * H * 4)               # backward-half scratch
    vmem_limit = int(min(100 * 2 ** 20, max(16 * 2 ** 20, 3 * resident)))

    vmem = pl.BlockSpec(memory_space=pltpu.MemorySpace.VMEM)
    kernel = functools.partial(_bigru_kernel, seq_len=T, batch=B, hidden=H)
    out2d = pl.pallas_call(
        kernel,
        out_shape=jax.ShapeDtypeStruct((T * B, 2 * H), f32),
        in_specs=[vmem] * 5,
        out_specs=vmem,
        scratch_shapes=[pltpu.VMEM((T * B, 6 * H), f32),    # fused gi slab
                        pltpu.VMEM((T * B, H), f32)],       # backward outputs (lane 0)
        compiler_params=pltpu.CompilerParams(vmem_limit_bytes=vmem_limit),
    )(x_blk, wih_blk, bih_blk, whh_blk, bhn)
    return out2d.reshape(T, B, 2 * H)                       # free, contiguous reshape


def init_params(key, input_size, hidden_size):
    """Deterministic init matching PyTorch GRU param shapes; weights stored pre-transposed
    so the math is x @ W_ih (I,3H) and h @ W_hh (H,3H); gate order (r, z, n)."""
    bound = 1.0 / jnp.sqrt(hidden_size)
    keys = jax.random.split(key, 8)

    def u(k, shape):
        return jax.random.uniform(k, shape, jnp.float32, -bound, bound)

    return {
        "wih_f": u(keys[0], (input_size, 3 * hidden_size)),
        "whh_f": u(keys[1], (hidden_size, 3 * hidden_size)),
        "bih_f": u(keys[2], (1, 3 * hidden_size)),
        "bhh_f": u(keys[3], (1, 3 * hidden_size)),
        "wih_b": u(keys[4], (input_size, 3 * hidden_size)),
        "whh_b": u(keys[5], (hidden_size, 3 * hidden_size)),
        "bih_b": u(keys[6], (1, 3 * hidden_size)),
        "bhh_b": u(keys[7], (1, 3 * hidden_size)),
    }


def _reference_bigru(x, params):
    """Pure-JAX f32 reference (lax.scan) matching PyTorch GRU semantics."""
    H = params["whh_f"].shape[0]

    def cell(h, x_t, wih, whh, bih, bhh):
        gi = x_t @ wih + bih
        gh = h @ whh + bhh
        r = jax.nn.sigmoid(gi[:, :H] + gh[:, :H])
        z = jax.nn.sigmoid(gi[:, H:2 * H] + gh[:, H:2 * H])
        n = jnp.tanh(gi[:, 2 * H:] + r * gh[:, 2 * H:])
        h_new = (1.0 - z) * n + z * h
        return h_new, h_new

    B = x.shape[1]
    h0 = jnp.zeros((B, H), jnp.float32)
    _, out_f = jax.lax.scan(
        lambda h, xt: cell(h, xt, params["wih_f"], params["whh_f"],
                           params["bih_f"], params["bhh_f"]), h0, x)
    _, out_b_rev = jax.lax.scan(
        lambda h, xt: cell(h, xt, params["wih_b"], params["whh_b"],
                           params["bih_b"], params["bhh_b"]), h0, x[::-1])
    return jnp.concatenate([out_f, out_b_rev[::-1]], axis=-1)


if __name__ == "__main__":
    T, B, I, H = 8, 2, 16, 32  # seq=8, batch=2, input_size=16, hidden_size=32

    key = jax.random.PRNGKey(0)
    k_x, k_p = jax.random.split(key)
    x = jax.random.normal(k_x, (T, B, I), jnp.float32)
    params = init_params(k_p, I, H)

    out = jax.jit(bigru_encode)(x, params)
    out = jax.block_until_ready(out)

    ref = _reference_bigru(x, params)
    assert out.shape == (T, B, 2 * H)
    # bf16 matmul operands (f32 accumulation) -> compare against the f32 reference loosely.
    assert jnp.allclose(out, ref, atol=2e-2, rtol=2e-2), \
        float(jnp.max(jnp.abs(out - ref)))

    print("KERNEL_OK")
</pallas_src>

<mosaic_0001>
module attributes {stable_mosaic.version = 11 : i64} {
  func.func @_bigru_kernel(%arg0: memref<16x32xbf16, #tpu.memory_space<vmem>>, %arg1: memref<32x192xbf16, #tpu.memory_space<vmem>>, %arg2: memref<1x192xf32, #tpu.memory_space<vmem>>, %arg3: memref<64x192xbf16, #tpu.memory_space<vmem>>, %arg4: memref<1x64xf32, #tpu.memory_space<vmem>>, %arg5: memref<16x64xf32, #tpu.memory_space<vmem>>, %arg6: memref<16x192xf32, #tpu.memory_space<vmem>>, %arg7: memref<16x32xf32, #tpu.memory_space<vmem>>) attributes {dimension_semantics = [], scalar_prefetch = 0 : i64, scratch_operands = 2 : i64, tpu.core_type = #tpu.core_type<tc>} {
    %c0 = arith.constant 0 : index
    %c0_0 = arith.constant 0 : index
    %0 = vector.load %arg0[%c0, %c0_0] : memref<16x32xbf16, #tpu.memory_space<vmem>>, vector<16x32xbf16>
    %c0_1 = arith.constant 0 : index
    %c0_2 = arith.constant 0 : index
    %1 = vector.load %arg1[%c0_1, %c0_2] : memref<32x192xbf16, #tpu.memory_space<vmem>>, vector<32x192xbf16>
    %cst = arith.constant dense<0.000000e+00> : vector<16x192xf32>
    %2 = tpu.matmul %0, %1, %cst {dimension_numbers = #tpu.dot_dimension_numbers<[1], [0], [0], [1], [0, 0, 1, 1], [], []>} : vector<16x32xbf16>, vector<32x192xbf16>, vector<16x192xf32> -> vector<16x192xf32>
    %c0_3 = arith.constant 0 : index
    %c0_4 = arith.constant 0 : index
    %3 = vector.load %arg2[%c0_3, %c0_4] : memref<1x192xf32, #tpu.memory_space<vmem>>, vector<1x192xf32>
    %4 = vector.broadcast %3 : vector<1x192xf32> to vector<16x192xf32>
    %5 = arith.addf %2, %4 : vector<16x192xf32>
    %c0_5 = arith.constant 0 : index
    %c0_6 = arith.constant 0 : index
    %6 = vector.load %arg6[%c0_5, %c0_6] : memref<16x192xf32, #tpu.memory_space<vmem>>, vector<16x192xf32>
    tpu.vector_store %arg6[%c0_5, %c0_6], %5 {strides = array<i32>} : memref<16x192xf32, #tpu.memory_space<vmem>>, vector<16x192xf32>,
    %c0_7 = arith.constant 0 : index
    %c0_8 = arith.constant 0 : index
    %7 = vector.load %arg4[%c0_7, %c0_8] : memref<1x64xf32, #tpu.memory_space<vmem>>, vector<1x64xf32>
    %8 = vector.shape_cast %7 : vector<1x64xf32> to vector<1x64xf32>
    %9 = vector.broadcast %8 : vector<1x64xf32> to vector<2x64xf32>
    %cst_9 = arith.constant 0.000000e+00 : f32
    %10 = vector.broadcast %cst_9 : f32 to vector<2x64xf32>
    %c0_i32 = arith.constant 0 : i32
    %c2_i32 = arith.constant 2 : i32
    %11 = arith.muli %c0_i32, %c2_i32 : i32
    %12 = arith.truncf %10 : vector<2x64xf32> to vector<2x64xbf16>
    %c0_10 = arith.constant 0 : index
    %c0_11 = arith.constant 0 : index
    %13 = vector.load %arg3[%c0_10, %c0_11] : memref<64x192xbf16, #tpu.memory_space<vmem>>, vector<64x192xbf16>
    %cst_12 = arith.constant dense<0.000000e+00> : vector<2x192xf32>
    %14 = tpu.matmul %12, %13, %cst_12 {dimension_numbers = #tpu.dot_dimension_numbers<[1], [0], [0], [1], [0, 0, 1, 1], [], []>} : vector<2x64xbf16>, vector<64x192xbf16>, vector<2x192xf32> -> vector<2x192xf32>
    %15 = arith.index_cast %11 : i32 to index
    %c0_13 = arith.constant 0 : index
    %16 = vector.load %arg6[%15, %c0_13] : memref<16x192xf32, #tpu.memory_space<vmem>>, vector<2x192xf32>
    %17 = vector.extract_strided_slice %16 {offsets = [0, 0], sizes = [2, 128], strides = [1, 1]} : vector<2x192xf32> to vector<2x128xf32>
    %18 = vector.extract_strided_slice %14 {offsets = [0, 0], sizes = [2, 128], strides = [1, 1]} : vector<2x192xf32> to vector<2x128xf32>
    %19 = arith.addf %17, %18 : vector<2x128xf32>
    %20 = arith.negf %19 : vector<2x128xf32>
    %21 = math.exp %20 : vector<2x128xf32>
    %cst_14 = arith.constant 1.000000e+00 : f32
    %22 = vector.broadcast %cst_14 : f32 to vector<2x128xf32>
    %23 = arith.addf %22, %21 : vector<2x128xf32>
    %24 = arith.divf %22, %23 : vector<2x128xf32>
    %25 = vector.extract_strided_slice %24 {offsets = [0, 0], sizes = [2, 64], strides = [1, 1]} : vector<2x128xf32> to vector<2x64xf32>
    %26 = vector.extract_strided_slice %24 {offsets = [0, 64], sizes = [2, 64], strides = [1, 1]} : vector<2x128xf32> to vector<2x64xf32>
    %27 = vector.extract_strided_slice %16 {offsets = [0, 128], sizes = [2, 64], strides = [1, 1]} : vector<2x192xf32> to vector<2x64xf32>
    %28 = vector.extract_strided_slice %14 {offsets = [0, 128], sizes = [2, 64], strides = [1, 1]} : vector<2x192xf32> to vector<2x64xf32>
    %29 = arith.addf %28, %9 : vector<2x64xf32>
    %30 = arith.mulf %25, %29 : vector<2x64xf32>
    %31 = arith.addf %27, %30 : vector<2x64xf32>
    %32 = math.tanh %31 : vector<2x64xf32>
    %33 = arith.subf %10, %32 : vector<2x64xf32>
    %34 = arith.mulf %26, %33 : vector<2x64xf32>
    %35 = arith.addf %32, %34 : vector<2x64xf32>
    %36 = vector.extract_strided_slice %35 {offsets = [0, 0], sizes = [2, 32], strides = [1, 1]} : vector<2x64xf32> to vector<2x32xf32>
    %37 = arith.index_cast %11 : i32 to index
    %c0_15 = arith.constant 0 : index
    %38 = vector.load %arg5[%37, %c0_15] : memref<16x64xf32, #tpu.memory_space<vmem>>, vector<2x32xf32>
    tpu.vector_store %arg5[%37, %c0_15], %36 {strides = array<i32>} : memref<16x64xf32, #tpu.memory_space<vmem>>, vector<2x32xf32>,
    %c7_i32 = arith.constant 7 : i32
    %39 = arith.subi %c7_i32, %c0_i32 : i32
    %c2_i32_16 = arith.constant 2 : i32
    %40 = arith.muli %39, %c2_i32_16 : i32
    %41 = vector.extract_strided_slice %35 {offsets = [0, 32], sizes = [2, 32], strides = [1, 1]} : vector<2x64xf32> to vector<2x32xf32>
    %42 = arith.index_cast %40 : i32 to index
    %c0_17 = arith.constant 0 : index
    %43 = vector.load %arg7[%42, %c0_17] : memref<16x32xf32, #tpu.memory_space<vmem>>, vector<2x32xf32>
    tpu.vector_store %arg7[%42, %c0_17], %41 {strides = array<i32>} : memref<16x32xf32, #tpu.memory_space<vmem>>, vector<2x32xf32>,
    %c1_i32 = arith.constant 1 : i32
    %c2_i32_18 = arith.constant 2 : i32
    %44 = arith.muli %c1_i32, %c2_i32_18 : i32
    %45 = arith.truncf %35 : vector<2x64xf32> to vector<2x64xbf16>
    %c0_19 = arith.constant 0 : index
    %c0_20 = arith.constant 0 : index
    %46 = vector.load %arg3[%c0_19, %c0_20] : memref<64x192xbf16, #tpu.memory_space<vmem>>, vector<64x192xbf16>
    %cst_21 = arith.constant dense<0.000000e+00> : vector<2x192xf32>
    %47 = tpu.matmul %45, %46, %cst_21 {dimension_numbers = #tpu.dot_dimension_numbers<[1], [0], [0], [1], [0, 0, 1, 1], [], []>} : vector<2x64xbf16>, vector<64x192xbf16>, vector<2x192xf32> -> vector<2x192xf32>
    %48 = arith.index_cast %44 : i32 to index
    %c0_22 = arith.constant 0 : index
    %49 = vector.load %arg6[%48, %c0_22] : memref<16x192xf32, #tpu.memory_space<vmem>>, vector<2x192xf32>
    %50 = vector.extract_strided_slice %49 {offsets = [0, 0], sizes = [2, 128], strides = [1, 1]} : vector<2x192xf32> to vector<2x128xf32>
    %51 = vector.extract_strided_slice %47 {offsets = [0, 0], sizes = [2, 128], strides = [1, 1]} : vector<2x192xf32> to vector<2x128xf32>
    %52 = arith.addf %50, %51 : vector<2x128xf32>
    %53 = arith.negf %52 : vector<2x128xf32>
    %54 = math.exp %53 : vector<2x128xf32>
    %cst_23 = arith.constant 1.000000e+00 : f32
    %55 = vector.broadcast %cst_23 : f32 to vector<2x128xf32>
    %56 = arith.addf %55, %54 : vector<2x128xf32>
    %57 = arith.divf %55, %56 : vector<2x128xf32>
    %58 = vector.extract_strided_slice %57 {offsets = [0, 0], sizes = [2, 64], strides = [1, 1]} : vector<2x128xf32> to vector<2x64xf32>
    %59 = vector.extract_strided_slice %57 {offsets = [0, 64], sizes = [2, 64], strides = [1, 1]} : vector<2x128xf32> to vector<2x64xf32>
    %60 = vector.extract_strided_slice %49 {offsets = [0, 128], sizes = [2, 64], strides = [1, 1]} : vector<2x192xf32> to vector<2x64xf32>
    %61 = vector.extract_strided_slice %47 {offsets = [0, 128], sizes = [2, 64], strides = [1, 1]} : vector<2x192xf32> to vector<2x64xf32>
    %62 = arith.addf %61, %9 : vector<2x64xf32>
    %63 = arith.mulf %58, %62 : vector<2x64xf32>
    %64 = arith.addf %60, %63 : vector<2x64xf32>
    %65 = math.tanh %64 : vector<2x64xf32>
    %66 = arith.subf %35, %65 : vector<2x64xf32>
    %67 = arith.mulf %59, %66 : vector<2x64xf32>
    %68 = arith.addf %65, %67 : vector<2x64xf32>
    %69 = vector.extract_strided_slice %68 {offsets = [0, 0], sizes = [2, 32], strides = [1, 1]} : vector<2x64xf32> to vector<2x32xf32>
    %70 = arith.index_cast %44 : i32 to index
    %c0_24 = arith.constant 0 : index
    %71 = vector.load %arg5[%70, %c0_24] : memref<16x64xf32, #tpu.memory_space<vmem>>, vector<2x32xf32>
    tpu.vector_store %arg5[%70, %c0_24], %69 {strides = array<i32>} : memref<16x64xf32, #tpu.memory_space<vmem>>, vector<2x32xf32>,
    %c7_i32_25 = arith.constant 7 : i32
    %72 = arith.subi %c7_i32_25, %c1_i32 : i32
    %c2_i32_26 = arith.constant 2 : i32
    %73 = arith.muli %72, %c2_i32_26 : i32
    %74 = vector.extract_strided_slice %68 {offsets = [0, 32], sizes = [2, 32], strides = [1, 1]} : vector<2x64xf32> to vector<2x32xf32>
    %75 = arith.index_cast %73 : i32 to index
    %c0_27 = arith.constant 0 : index
    %76 = vector.load %arg7[%75, %c0_27] : memref<16x32xf32, #tpu.memory_space<vmem>>, vector<2x32xf32>
    tpu.vector_store %arg7[%75, %c0_27], %74 {strides = array<i32>} : memref<16x32xf32, #tpu.memory_space<vmem>>, vector<2x32xf32>,
    %c2_i32_28 = arith.constant 2 : i32
    %c2_i32_29 = arith.constant 2 : i32
    %77 = arith.muli %c2_i32_28, %c2_i32_29 : i32
    %78 = arith.truncf %68 : vector<2x64xf32> to vector<2x64xbf16>
    %c0_30 = arith.constant 0 : index
    %c0_31 = arith.constant 0 : index
    %79 = vector.load %arg3[%c0_30, %c0_31] : memref<64x192xbf16, #tpu.memory_space<vmem>>, vector<64x192xbf16>
    %cst_32 = arith.constant dense<0.000000e+00> : vector<2x192xf32>
    %80 = tpu.matmul %78, %79, %cst_32 {dimension_numbers = #tpu.dot_dimension_numbers<[1], [0], [0], [1], [0, 0, 1, 1], [], []>} : vector<2x64xbf16>, vector<64x192xbf16>, vector<2x192xf32> -> vector<2x192xf32>
    %81 = arith.index_cast %77 : i32 to index
    %c0_33 = arith.constant 0 : index
    %82 = vector.load %arg6[%81, %c0_33] : memref<16x192xf32, #tpu.memory_space<vmem>>, vector<2x192xf32>
    %83 = vector.extract_strided_slice %82 {offsets = [0, 0], sizes = [2, 128], strides = [1, 1]} : vector<2x192xf32> to vector<2x128xf32>
    %84 = vector.extract_strided_slice %80 {offsets = [0, 0], sizes = [2, 128], strides = [1, 1]} : vector<2x192xf32> to vector<2x128xf32>
    %85 = arith.addf %83, %84 : vector<2x128xf32>
    %86 = arith.negf %85 : vector<2x128xf32>
    %87 = math.exp %86 : vector<2x128xf32>
    %cst_34 = arith.constant 1.000000e+00 : f32
    %88 = vector.broadcast %cst_34 : f32 to vector<2x128xf32>
    %89 = arith.addf %88, %87 : vector<2x128xf32>
    %90 = arith.divf %88, %89 : vector<2x128xf32>
    %91 = vector.extract_strided_slice %90 {offsets = [0, 0], sizes = [2, 64], strides = [1, 1]} : vector<2x128xf32> to vector<2x64xf32>
    %92 = vector.extract_strided_slice %90 {offsets = [0, 64], sizes = [2, 64], strides = [1, 1]} : vector<2x128xf32> to vector<2x64xf32>
    %93 = vector.extract_strided_slice %82 {offsets = [0, 128], sizes = [2, 64], strides = [1, 1]} : vector<2x192xf32> to vector<2x64xf32>
    %94 = vector.extract_strided_slice %80 {offsets = [0, 128], sizes = [2, 64], strides = [1, 1]} : vector<2x192xf32> to vector<2x64xf32>
    %95 = arith.addf %94, %9 : vector<2x64xf32>
    %96 = arith.mulf %91, %95 : vector<2x64xf32>
    %97 = arith.addf %93, %96 : vector<2x64xf32>
    %98 = math.tanh %97 : vector<2x64xf32>
    %99 = arith.subf %68, %98 : vector<2x64xf32>
    %100 = arith.mulf %92, %99 : vector<2x64xf32>
    %101 = arith.addf %98, %100 : vector<2x64xf32>
    %102 = vector.extract_strided_slice %101 {offsets = [0, 0], sizes = [2, 32], strides = [1, 1]} : vector<2x64xf32> to vector<2x32xf32>
    %103 = arith.index_cast %77 : i32 to index
    %c0_35 = arith.constant 0 : index
    %104 = vector.load %arg5[%103, %c0_35] : memref<16x64xf32, #tpu.memory_space<vmem>>, vector<2x32xf32>
    tpu.vector_store %arg5[%103, %c0_35], %102 {strides = array<i32>} : memref<16x64xf32, #tpu.memory_space<vmem>>, vector<2x32xf32>,
    %c7_i32_36 = arith.constant 7 : i32
    %105 = arith.subi %c7_i32_36, %c2_i32_28 : i32
    %c2_i32_37 = arith.constant 2 : i32
    %106 = arith.muli %105, %c2_i32_37 : i32
    %107 = vector.extract_strided_slice %101 {offsets = [0, 32], sizes = [2, 32], strides = [1, 1]} : vector<2x64xf32> to vector<2x32xf32>
    %108 = arith.index_cast %106 : i32 to index
    %c0_38 = arith.constant 0 : index
    %109 = vector.load %arg7[%108, %c0_38] : memref<16x32xf32, #tpu.memory_space<vmem>>, vector<2x32xf32>
    tpu.vector_store %arg7[%108, %c0_38], %107 {strides = array<i32>} : memref<16x32xf32, #tpu.memory_space<vmem>>, vector<2x32xf32>,
    %c3_i32 = arith.constant 3 : i32
    %c2_i32_39 = arith.constant 2 : i32
    %110 = arith.muli %c3_i32, %c2_i32_39 : i32
    %111 = arith.truncf %101 : vector<2x64xf32> to vector<2x64xbf16>
    %c0_40 = arith.constant 0 : index
    %c0_41 = arith.constant 0 : index
    %112 = vector.load %arg3[%c0_40, %c0_41] : memref<64x192xbf16, #tpu.memory_space<vmem>>, vector<64x192xbf16>
    %cst_42 = arith.constant dense<0.000000e+00> : vector<2x192xf32>
    %113 = tpu.matmul %111, %112, %cst_42 {dimension_numbers = #tpu.dot_dimension_numbers<[1], [0], [0], [1], [0, 0, 1, 1], [], []>} : vector<2x64xbf16>, vector<64x192xbf16>, vector<2x192xf32> -> vector<2x192xf32>
    %114 = arith.index_cast %110 : i32 to index
    %c0_43 = arith.constant 0 : index
    %115 = vector.load %arg6[%114, %c0_43] : memref<16x192xf32, #tpu.memory_space<vmem>>, vector<2x192xf32>
    %116 = vector.extract_strided_slice %115 {offsets = [0, 0], sizes = [2, 128], strides = [1, 1]} : vector<2x192xf32> to vector<2x128xf32>
    %117 = vector.extract_strided_slice %113 {offsets = [0, 0], sizes = [2, 128], strides = [1, 1]} : vector<2x192xf32> to vector<2x128xf32>
    %118 = arith.addf %116, %117 : vector<2x128xf32>
    %119 = arith.negf %118 : vector<2x128xf32>
    %120 = math.exp %119 : vector<2x128xf32>
    %cst_44 = arith.constant 1.000000e+00 : f32
    %121 = vector.broadcast %cst_44 : f32 to vector<2x128xf32>
    %122 = arith.addf %121, %120 : vector<2x128xf32>
    %123 = arith.divf %121, %122 : vector<2x128xf32>
    %124 = vector.extract_strided_slice %123 {offsets = [0, 0], sizes = [2, 64], strides = [1, 1]} : vector<2x128xf32> to vector<2x64xf32>
    %125 = vector.extract_strided_slice %123 {offsets = [0, 64], sizes = [2, 64], strides = [1, 1]} : vector<2x128xf32> to vector<2x64xf32>
    %126 = vector.extract_strided_slice %115 {offsets = [0, 128], sizes = [2, 64], strides = [1, 1]} : vector<2x192xf32> to vector<2x64xf32>
    %127 = vector.extract_strided_slice %113 {offsets = [0, 128], sizes = [2, 64], strides = [1, 1]} : vector<2x192xf32> to vector<2x64xf32>
    %128 = arith.addf %127, %9 : vector<2x64xf32>
    %129 = arith.mulf %124, %128 : vector<2x64xf32>
    %130 = arith.addf %126, %129 : vector<2x64xf32>
    %131 = math.tanh %130 : vector<2x64xf32>
    %132 = arith.subf %101, %131 : vector<2x64xf32>
    %133 = arith.mulf %125, %132 : vector<2x64xf32>
    %134 = arith.addf %131, %133 : vector<2x64xf32>
    %135 = vector.extract_strided_slice %134 {offsets = [0, 0], sizes = [2, 32], strides = [1, 1]} : vector<2x64xf32> to vector<2x32xf32>
    %136 = arith.index_cast %110 : i32 to index
    %c0_45 = arith.constant 0 : index
    %137 = vector.load %arg5[%136, %c0_45] : memref<16x64xf32, #tpu.memory_space<vmem>>, vector<2x32xf32>
    tpu.vector_store %arg5[%136, %c0_45], %135 {strides = array<i32>} : memref<16x64xf32, #tpu.memory_space<vmem>>, vector<2x32xf32>,
    %c7_i32_46 = arith.constant 7 : i32
    %138 = arith.subi %c7_i32_46, %c3_i32 : i32
    %c2_i32_47 = arith.constant 2 : i32
    %139 = arith.muli %138, %c2_i32_47 : i32
    %140 = vector.extract_strided_slice %134 {offsets = [0, 32], sizes = [2, 32], strides = [1, 1]} : vector<2x64xf32> to vector<2x32xf32>
    %141 = arith.index_cast %139 : i32 to index
    %c0_48 = arith.constant 0 : index
    %142 = vector.load %arg7[%141, %c0_48] : memref<16x32xf32, #tpu.memory_space<vmem>>, vector<2x32xf32>
    tpu.vector_store %arg7[%141, %c0_48], %140 {strides = array<i32>} : memref<16x32xf32, #tpu.memory_space<vmem>>, vector<2x32xf32>,
    %c4_i32 = arith.constant 4 : i32
    %c2_i32_49 = arith.constant 2 : i32
    %143 = arith.muli %c4_i32, %c2_i32_49 : i32
    %144 = arith.truncf %134 : vector<2x64xf32> to vector<2x64xbf16>
    %c0_50 = arith.constant 0 : index
    %c0_51 = arith.constant 0 : index
    %145 = vector.load %arg3[%c0_50, %c0_51] : memref<64x192xbf16, #tpu.memory_space<vmem>>, vector<64x192xbf16>
    %cst_52 = arith.constant dense<0.000000e+00> : vector<2x192xf32>
    %146 = tpu.matmul %144, %145, %cst_52 {dimension_numbers = #tpu.dot_dimension_numbers<[1], [0], [0], [1], [0, 0, 1, 1], [], []>} : vector<2x64xbf16>, vector<64x192xbf16>, vector<2x192xf32> -> vector<2x192xf32>
    %147 = arith.index_cast %143 : i32 to index
    %c0_53 = arith.constant 0 : index
    %148 = vector.load %arg6[%147, %c0_53] : memref<16x192xf32, #tpu.memory_space<vmem>>, vector<2x192xf32>
    %149 = vector.extract_strided_slice %148 {offsets = [0, 0], sizes = [2, 128], strides = [1, 1]} : vector<2x192xf32> to vector<2x128xf32>
    %150 = vector.extract_strided_slice %146 {offsets = [0, 0], sizes = [2, 128], strides = [1, 1]} : vector<2x192xf32> to vector<2x128xf32>
    %151 = arith.addf %149, %150 : vector<2x128xf32>
    %152 = arith.negf %151 : vector<2x128xf32>
    %153 = math.exp %152 : vector<2x128xf32>
    %cst_54 = arith.constant 1.000000e+00 : f32
    %154 = vector.broadcast %cst_54 : f32 to vector<2x128xf32>
    %155 = arith.addf %154, %153 : vector<2x128xf32>
    %156 = arith.divf %154, %155 : vector<2x128xf32>
    %157 = vector.extract_strided_slice %156 {offsets = [0, 0], sizes = [2, 64], strides = [1, 1]} : vector<2x128xf32> to vector<2x64xf32>
    %158 = vector.extract_strided_slice %156 {offsets = [0, 64], sizes = [2, 64], strides = [1, 1]} : vector<2x128xf32> to vector<2x64xf32>
    %159 = vector.extract_strided_slice %148 {offsets = [0, 128], sizes = [2, 64], strides = [1, 1]} : vector<2x192xf32> to vector<2x64xf32>
    %160 = vector.extract_strided_slice %146 {offsets = [0, 128], sizes = [2, 64], strides = [1, 1]} : vector<2x192xf32> to vector<2x64xf32>
    %161 = arith.addf %160, %9 : vector<2x64xf32>
    %162 = arith.mulf %157, %161 : vector<2x64xf32>
    %163 = arith.addf %159, %162 : vector<2x64xf32>
    %164 = math.tanh %163 : vector<2x64xf32>
    %165 = arith.subf %134, %164 : vector<2x64xf32>
    %166 = arith.mulf %158, %165 : vector<2x64xf32>
    %167 = arith.addf %164, %166 : vector<2x64xf32>
    %168 = vector.extract_strided_slice %167 {offsets = [0, 0], sizes = [2, 32], strides = [1, 1]} : vector<2x64xf32> to vector<2x32xf32>
    %169 = arith.index_cast %143 : i32 to index
    %c0_55 = arith.constant 0 : index
    %170 = vector.load %arg5[%169, %c0_55] : memref<16x64xf32, #tpu.memory_space<vmem>>, vector<2x32xf32>
    tpu.vector_store %arg5[%169, %c0_55], %168 {strides = array<i32>} : memref<16x64xf32, #tpu.memory_space<vmem>>, vector<2x32xf32>,
    %c7_i32_56 = arith.constant 7 : i32
    %171 = arith.subi %c7_i32_56, %c4_i32 : i32
    %c2_i32_57 = arith.constant 2 : i32
    %172 = arith.muli %171, %c2_i32_57 : i32
    %173 = vector.extract_strided_slice %167 {offsets = [0, 32], sizes = [2, 32], strides = [1, 1]} : vector<2x64xf32> to vector<2x32xf32>
    %174 = arith.index_cast %172 : i32 to index
    %c0_58 = arith.constant 0 : index
    %175 = vector.load %arg7[%174, %c0_58] : memref<16x32xf32, #tpu.memory_space<vmem>>, vector<2x32xf32>
    tpu.vector_store %arg7[%174, %c0_58], %173 {strides = array<i32>} : memref<16x32xf32, #tpu.memory_space<vmem>>, vector<2x32xf32>,
    %c5_i32 = arith.constant 5 : i32
    %c2_i32_59 = arith.constant 2 : i32
    %176 = arith.muli %c5_i32, %c2_i32_59 : i32
    %177 = arith.truncf %167 : vector<2x64xf32> to vector<2x64xbf16>
    %c0_60 = arith.constant 0 : index
    %c0_61 = arith.constant 0 : index
    %178 = vector.load %arg3[%c0_60, %c0_61] : memref<64x192xbf16, #tpu.memory_space<vmem>>, vector<64x192xbf16>
    %cst_62 = arith.constant dense<0.000000e+00> : vector<2x192xf32>
    %179 = tpu.matmul %177, %178, %cst_62 {dimension_numbers = #tpu.dot_dimension_numbers<[1], [0], [0], [1], [0, 0, 1, 1], [], []>} : vector<2x64xbf16>, vector<64x192xbf16>, vector<2x192xf32> -> vector<2x192xf32>
    %180 = arith.index_cast %176 : i32 to index
    %c0_63 = arith.constant 0 : index
    %181 = vector.load %arg6[%180, %c0_63] : memref<16x192xf32, #tpu.memory_space<vmem>>, vector<2x192xf32>
    %182 = vector.extract_strided_slice %181 {offsets = [0, 0], sizes = [2, 128], strides = [1, 1]} : vector<2x192xf32> to vector<2x128xf32>
    %183 = vector.extract_strided_slice %179 {offsets = [0, 0], sizes = [2, 128], strides = [1, 1]} : vector<2x192xf32> to vector<2x128xf32>
    %184 = arith.addf %182, %183 : vector<2x128xf32>
    %185 = arith.negf %184 : vector<2x128xf32>
    %186 = math.exp %185 : vector<2x128xf32>
    %cst_64 = arith.constant 1.000000e+00 : f32
    %187 = vector.broadcast %cst_64 : f32 to vector<2x128xf32>
    %188 = arith.addf %187, %186 : vector<2x128xf32>
    %189 = arith.divf %187, %188 : vector<2x128xf32>
    %190 = vector.extract_strided_slice %189 {offsets = [0, 0], sizes = [2, 64], strides = [1, 1]} : vector<2x128xf32> to vector<2x64xf32>
    %191 = vector.extract_strided_slice %189 {offsets = [0, 64], sizes = [2, 64], strides = [1, 1]} : vector<2x128xf32> to vector<2x64xf32>
    %192 = vector.extract_strided_slice %181 {offsets = [0, 128], sizes = [2, 64], strides = [1, 1]} : vector<2x192xf32> to vector<2x64xf32>
    %193 = vector.extract_strided_slice %179 {offsets = [0, 128], sizes = [2, 64], strides = [1, 1]} : vector<2x192xf32> to vector<2x64xf32>
    %194 = arith.addf %193, %9 : vector<2x64xf32>
    %195 = arith.mulf %190, %194 : vector<2x64xf32>
    %196 = arith.addf %192, %195 : vector<2x64xf32>
    %197 = math.tanh %196 : vector<2x64xf32>
    %198 = arith.subf %167, %197 : vector<2x64xf32>
    %199 = arith.mulf %191, %198 : vector<2x64xf32>
    %200 = arith.addf %197, %199 : vector<2x64xf32>
    %201 = vector.extract_strided_slice %200 {offsets = [0, 0], sizes = [2, 32], strides = [1, 1]} : vector<2x64xf32> to vector<2x32xf32>
    %202 = arith.index_cast %176 : i32 to index
    %c0_65 = arith.constant 0 : index
    %203 = vector.load %arg5[%202, %c0_65] : memref<16x64xf32, #tpu.memory_space<vmem>>, vector<2x32xf32>
    tpu.vector_store %arg5[%202, %c0_65], %201 {strides = array<i32>} : memref<16x64xf32, #tpu.memory_space<vmem>>, vector<2x32xf32>,
    %c7_i32_66 = arith.constant 7 : i32
    %204 = arith.subi %c7_i32_66, %c5_i32 : i32
    %c2_i32_67 = arith.constant 2 : i32
    %205 = arith.muli %204, %c2_i32_67 : i32
    %206 = vector.extract_strided_slice %200 {offsets = [0, 32], sizes = [2, 32], strides = [1, 1]} : vector<2x64xf32> to vector<2x32xf32>
    %207 = arith.index_cast %205 : i32 to index
    %c0_68 = arith.constant 0 : index
    %208 = vector.load %arg7[%207, %c0_68] : memref<16x32xf32, #tpu.memory_space<vmem>>, vector<2x32xf32>
    tpu.vector_store %arg7[%207, %c0_68], %206 {strides = array<i32>} : memref<16x32xf32, #tpu.memory_space<vmem>>, vector<2x32xf32>,
    %c6_i32 = arith.constant 6 : i32
    %c2_i32_69 = arith.constant 2 : i32
    %209 = arith.muli %c6_i32, %c2_i32_69 : i32
    %210 = arith.truncf %200 : vector<2x64xf32> to vector<2x64xbf16>
    %c0_70 = arith.constant 0 : index
    %c0_71 = arith.constant 0 : index
    %211 = vector.load %arg3[%c0_70, %c0_71] : memref<64x192xbf16, #tpu.memory_space<vmem>>, vector<64x192xbf16>
    %cst_72 = arith.constant dense<0.000000e+00> : vector<2x192xf32>
    %212 = tpu.matmul %210, %211, %cst_72 {dimension_numbers = #tpu.dot_dimension_numbers<[1], [0], [0], [1], [0, 0, 1, 1], [], []>} : vector<2x64xbf16>, vector<64x192xbf16>, vector<2x192xf32> -> vector<2x192xf32>
    %213 = arith.index_cast %209 : i32 to index
    %c0_73 = arith.constant 0 : index
    %214 = vector.load %arg6[%213, %c0_73] : memref<16x192xf32, #tpu.memory_space<vmem>>, vector<2x192xf32>
    %215 = vector.extract_strided_slice %214 {offsets = [0, 0], sizes = [2, 128], strides = [1, 1]} : vector<2x192xf32> to vector<2x128xf32>
    %216 = vector.extract_strided_slice %212 {offsets = [0, 0], sizes = [2, 128], strides = [1, 1]} : vector<2x192xf32> to vector<2x128xf32>
    %217 = arith.addf %215, %216 : vector<2x128xf32>
    %218 = arith.negf %217 : vector<2x128xf32>
    %219 = math.exp %218 : vector<2x128xf32>
    %cst_74 = arith.constant 1.000000e+00 : f32
    %220 = vector.broadcast %cst_74 : f32 to vector<2x128xf32>
    %221 = arith.addf %220, %219 : vector<2x128xf32>
    %222 = arith.divf %220, %221 : vector<2x128xf32>
    %223 = vector.extract_strided_slice %222 {offsets = [0, 0], sizes = [2, 64], strides = [1, 1]} : vector<2x128xf32> to vector<2x64xf32>
    %224 = vector.extract_strided_slice %222 {offsets = [0, 64], sizes = [2, 64], strides = [1, 1]} : vector<2x128xf32> to vector<2x64xf32>
    %225 = vector.extract_strided_slice %214 {offsets = [0, 128], sizes = [2, 64], strides = [1, 1]} : vector<2x192xf32> to vector<2x64xf32>
    %226 = vector.extract_strided_slice %212 {offsets = [0, 128], sizes = [2, 64], strides = [1, 1]} : vector<2x192xf32> to vector<2x64xf32>
    %227 = arith.addf %226, %9 : vector<2x64xf32>
    %228 = arith.mulf %223, %227 : vector<2x64xf32>
    %229 = arith.addf %225, %228 : vector<2x64xf32>
    %230 = math.tanh %229 : vector<2x64xf32>
    %231 = arith.subf %200, %230 : vector<2x64xf32>
    %232 = arith.mulf %224, %231 : vector<2x64xf32>
    %233 = arith.addf %230, %232 : vector<2x64xf32>
    %234 = vector.extract_strided_slice %233 {offsets = [0, 0], sizes = [2, 32], strides = [1, 1]} : vector<2x64xf32> to vector<2x32xf32>
    %235 = arith.index_cast %209 : i32 to index
    %c0_75 = arith.constant 0 : index
    %236 = vector.load %arg5[%235, %c0_75] : memref<16x64xf32, #tpu.memory_space<vmem>>, vector<2x32xf32>
    tpu.vector_store %arg5[%235, %c0_75], %234 {strides = array<i32>} : memref<16x64xf32, #tpu.memory_space<vmem>>, vector<2x32xf32>,
    %c7_i32_76 = arith.constant 7 : i32
    %237 = arith.subi %c7_i32_76, %c6_i32 : i32
    %c2_i32_77 = arith.constant 2 : i32
    %238 = arith.muli %237, %c2_i32_77 : i32
    %239 = vector.extract_strided_slice %233 {offsets = [0, 32], sizes = [2, 32], strides = [1, 1]} : vector<2x64xf32> to vector<2x32xf32>
    %240 = arith.index_cast %238 : i32 to index
    %c0_78 = arith.constant 0 : index
    %241 = vector.load %arg7[%240, %c0_78] : memref<16x32xf32, #tpu.memory_space<vmem>>, vector<2x32xf32>
    tpu.vector_store %arg7[%240, %c0_78], %239 {strides = array<i32>} : memref<16x32xf32, #tpu.memory_space<vmem>>, vector<2x32xf32>,
    %c7_i32_79 = arith.constant 7 : i32
    %c2_i32_80 = arith.constant 2 : i32
    %242 = arith.muli %c7_i32_79, %c2_i32_80 : i32
    %243 = arith.truncf %233 : vector<2x64xf32> to vector<2x64xbf16>
    %c0_81 = arith.constant 0 : index
    %c0_82 = arith.constant 0 : index
    %244 = vector.load %arg3[%c0_81, %c0_82] : memref<64x192xbf16, #tpu.memory_space<vmem>>, vector<64x192xbf16>
    %cst_83 = arith.constant dense<0.000000e+00> : vector<2x192xf32>
    %245 = tpu.matmul %243, %244, %cst_83 {dimension_numbers = #tpu.dot_dimension_numbers<[1], [0], [0], [1], [0, 0, 1, 1], [], []>} : vector<2x64xbf16>, vector<64x192xbf16>, vector<2x192xf32> -> vector<2x192xf32>
    %246 = arith.index_cast %242 : i32 to index
    %c0_84 = arith.constant 0 : index
    %247 = vector.load %arg6[%246, %c0_84] : memref<16x192xf32, #tpu.memory_space<vmem>>, vector<2x192xf32>
    %248 = vector.extract_strided_slice %247 {offsets = [0, 0], sizes = [2, 128], strides = [1, 1]} : vector<2x192xf32> to vector<2x128xf32>
    %249 = vector.extract_strided_slice %245 {offsets = [0, 0], sizes = [2, 128], strides = [1, 1]} : vector<2x192xf32> to vector<2x128xf32>
    %250 = arith.addf %248, %249 : vector<2x128xf32>
    %251 = arith.negf %250 : vector<2x128xf32>
    %252 = math.exp %251 : vector<2x128xf32>
    %cst_85 = arith.constant 1.000000e+00 : f32
    %253 = vector.broadcast %cst_85 : f32 to vector<2x128xf32>
    %254 = arith.addf %253, %252 : vector<2x128xf32>
    %255 = arith.divf %253, %254 : vector<2x128xf32>
    %256 = vector.extract_strided_slice %255 {offsets = [0, 0], sizes = [2, 64], strides = [1, 1]} : vector<2x128xf32> to vector<2x64xf32>
    %257 = vector.extract_strided_slice %255 {offsets = [0, 64], sizes = [2, 64], strides = [1, 1]} : vector<2x128xf32> to vector<2x64xf32>
    %258 = vector.extract_strided_slice %247 {offsets = [0, 128], sizes = [2, 64], strides = [1, 1]} : vector<2x192xf32> to vector<2x64xf32>
    %259 = vector.extract_strided_slice %245 {offsets = [0, 128], sizes = [2, 64], strides = [1, 1]} : vector<2x192xf32> to vector<2x64xf32>
    %260 = arith.addf %259, %9 : vector<2x64xf32>
    %261 = arith.mulf %256, %260 : vector<2x64xf32>
    %262 = arith.addf %258, %261 : vector<2x64xf32>
    %263 = math.tanh %262 : vector<2x64xf32>
    %264 = arith.subf %233, %263 : vector<2x64xf32>
    %265 = arith.mulf %257, %264 : vector<2x64xf32>
    %266 = arith.addf %263, %265 : vector<2x64xf32>
    %267 = vector.extract_strided_slice %266 {offsets = [0, 0], sizes = [2, 32], strides = [1, 1]} : vector<2x64xf32> to vector<2x32xf32>
    %268 = arith.index_cast %242 : i32 to index
    %c0_86 = arith.constant 0 : index
    %269 = vector.load %arg5[%268, %c0_86] : memref<16x64xf32, #tpu.memory_space<vmem>>, vector<2x32xf32>
    tpu.vector_store %arg5[%268, %c0_86], %267 {strides = array<i32>} : memref<16x64xf32, #tpu.memory_space<vmem>>, vector<2x32xf32>,
    %c7_i32_87 = arith.constant 7 : i32
    %270 = arith.subi %c7_i32_87, %c7_i32_79 : i32
    %c2_i32_88 = arith.constant 2 : i32
    %271 = arith.muli %270, %c2_i32_88 : i32
    %272 = vector.extract_strided_slice %266 {offsets = [0, 32], sizes = [2, 32], strides = [1, 1]} : vector<2x64xf32> to vector<2x32xf32>
    %273 = arith.index_cast %271 : i32 to index
    %c0_89 = arith.constant 0 : index
    %274 = vector.load %arg7[%273, %c0_89] : memref<16x32xf32, #tpu.memory_space<vmem>>, vector<2x32xf32>
    tpu.vector_store %arg7[%273, %c0_89], %272 {strides = array<i32>} : memref<16x32xf32, #tpu.memory_space<vmem>>, vector<2x32xf32>,
    %c8_i32 = arith.constant 8 : i32
    %c0_90 = arith.constant 0 : index
    %c0_91 = arith.constant 0 : index
    %275 = vector.load %arg7[%c0_90, %c0_91] : memref<16x32xf32, #tpu.memory_space<vmem>>, vector<16x32xf32>
    %c0_92 = arith.constant 0 : index
    %c32 = arith.constant 32 : index
    %276 = vector.load %arg5[%c0_92, %c32] : memref<16x64xf32, #tpu.memory_space<vmem>>, vector<16x32xf32>
    tpu.vector_store %arg5[%c0_92, %c32], %275 {strides = array<i32>} : memref<16x64xf32, #tpu.memory_space<vmem>>, vector<16x32xf32>,
    return
  }
}

</mosaic_0001>

<llo_original>
// kernel: bigru_encode.1
$region0: #{bigru_encode.1}
  #allocation0 [shape = 'u32[]', space=smem, size = 0x4, offset = 0x4, fixed_abs, tag = 'smem constant byte address 0x4 - core index']
  #allocation1 [shape = 'u32[72,128]{1,0:T(1,128)}', space=vmem, size = 0x9000, scoped, tag = 'internal scratch']
  #allocation2 [shape = 'f32[16,192]{1,0:T(8,128)}', space=vmem, size = 0x4000, scoped, tag = 'scratch operand']
  #allocation3 [shape = 'f32[16,32]{1,0:T(8,128)}', space=vmem, size = 0x2000, scoped, tag = 'scratch operand']
  %s0 = inlined_call_operand.vmem [shape: bf16[16,32], index: 0, kind: input, shape index: {}]
  %s1 = inlined_call_operand.vmem [shape: bf16[32,192], index: 1, kind: input, shape index: {}]
  %s2 = inlined_call_operand.vmem [shape: f32[1,192], index: 2, kind: input, shape index: {}]
  %s3 = inlined_call_operand.vmem [shape: bf16[64,192], index: 3, kind: input, shape index: {}]
  %s4 = inlined_call_operand.vmem [shape: f32[1,64], index: 4, kind: input, shape index: {}]
  %s5 = inlined_call_operand.hbm [shape: f32[16,64], index: 5, kind: output, shape index: {}]
  %s6 = sld [smem:[#allocation0]]
  $region30: #{bigru_encode.1} parent=0
    _
  %s8 = ssub.s32 1, %s6
  %s9 = scalar_select 0, %s8, %s6
  $region1: #{bigru_encode.1} parent=0
    #allocation4 [shape = 'u8[8192]{0}', space=vmem, size = 0x2000, scoped, tag = 'output window, operand 0, single buffered']
    #allocation5 [shape = 's32[1]{0}', space=sflag, size = 0x4, scoped, tag = 'scoped memory for bigru_encode.1']
    %10 = vsyncpa [#allocation5], 0
    // Predicated region
    $region2: #{bigru_encode.1} parent=1 // pred_check
      _
    $region3: #{bigru_encode.1} parent=1 // pred_check_branch
      %12 = sbr.rel (0) target = $region5
    $region4: #{bigru_encode.1} parent=1 // pred_region
      _
    $region5: #{bigru_encode.1} parent=1 // pred_fallthru
      _
    // Predicated region
    $region6: #{bigru_encode.1} parent=1 // pred_check
      _
    $region7: #{bigru_encode.1} parent=1 // pred_check_branch
      %14 = sbr.rel (0) target = $region9
    $region8: #{bigru_encode.1} parent=1 // pred_region
      _
    $region9: #{bigru_encode.1} parent=1 // pred_fallthru
      _
    // Predicated region
    $region10: #{bigru_encode.1} parent=1 // pred_check
      _
    $region11: #{bigru_encode.1} parent=1 // pred_check_branch
      %16 = sbr.rel (0) target = $region13
    $region12: #{bigru_encode.1} parent=1 // pred_region
      _
    $region13: #{bigru_encode.1} parent=1 // pred_fallthru
      _
    // Predicated region
    $region14: #{bigru_encode.1} parent=1 // pred_check
      _
    $region15: #{bigru_encode.1} parent=1 // pred_check_branch
      %18 = sbr.rel (0) target = $region17
    $region16: #{bigru_encode.1} parent=1 // pred_region
      _
    $region17: #{bigru_encode.1} parent=1 // pred_fallthru
      _
    // Predicated region
    $region18: #{bigru_encode.1} parent=1 // pred_check
      _
    $region19: #{bigru_encode.1} parent=1 // pred_check_branch
      %20 = sbr.rel (0) target = $region21
    $region20: #{bigru_encode.1} parent=1 // pred_region
      _
    $region21: #{bigru_encode.1} parent=1 // pred_fallthru
      _
    %v22 = vld [vmem:[%s0] sm:$0xf]
    %v23 = vld [vmem:[%s0 + $0x4] sm:$0xf]
    %v24 = vld [vmem:[%s1] sm:$0xff]
    %v25 = vld [vmem:[%s1 + $0x8] sm:$0xff]
    %v26 = vld [vmem:[%s1 + $0x10] sm:$0xff]
    %v27 = vld [vmem:[%s1 + $0x18] sm:$0xff]
    %v28 = vld [vmem:[%s2] sm:$0x3]
    %v30 = vperm.slane %v28, 0
    %v31 = vperm.slane %v28, 1
    %v36 = vunpack.c.l.b16 %v22
    %v37 = vunpack.c.l.b16 %v23
    %v38 = vpack.c.b16 %v37, %v36
    %v43 = vunpack.c.l.b16 %v24
    %v44 = vunpack.c.h.b16 %v24
    %v45 = vunpack.c.l.b16 %v25
    %v46 = vunpack.c.h.b16 %v25
    %v47 = vunpack.c.l.b16 %v26
    %v48 = vunpack.c.h.b16 %v26
    %v49 = vunpack.c.l.b16 %v27
    %v50 = vunpack.c.h.b16 %v27
    %v51 = vpack.c.b16 %v45, %v43
    %v52 = vpack.c.b16 %v46, %v44
    %v53 = vpack.c.b16 %v49, %v47
    %v54 = vpack.c.b16 %v50, %v48
    %vm59 = vcmask 261120
    %v61 = vsel %vm59, %v38, 0
    %63 = vmatpush.bf16.msra.mxu0 0
    %64 = vmatpush.bf16.msra.mxu0 0
    %65 = vmatpush.bf16.msra.mxu0 0
    %66 = vmatpush.bf16.msra.mxu0 0
    %67 = vmatpush.bf16.msra.mxu0 0
    %68 = vmatpush.bf16.msra.mxu0 0
    %69 = vmatpush.bf16.msra.mxu0 %v53
    %70 = vmatpush.bf16.msra.mxu0 %v51
    %71 = vmatmul.bf16.gmra.mxu0 %v61
    %v72 = vpop.f32.mrf.mxu0
    %v73 = vadd.f32 %v30, %v72
    %v74 = vpop.f32.mrf.mxu0
    %v75 = vadd.f32 %v30, %v74
    %76 = vdwg.mxu0
    %77 = vmatpush.bf16.msra.mxu0 0
    %78 = vmatpush.bf16.msra.mxu0 0
    %79 = vmatpush.bf16.msra.mxu0 0
    %80 = vmatpush.bf16.msra.mxu0 0
    %81 = vmatpush.bf16.msra.mxu0 0
    %82 = vmatpush.bf16.msra.mxu0 0
    %83 = vmatpush.bf16.msra.mxu0 %v54
    %84 = vmatpush.bf16.msra.mxu0 %v52
    %85 = vmatmul.bf16.gmra.mxu0 %v61
    %v86 = vpop.f32.mrf.mxu0
    %v87 = vadd.f32 %v31, %v86
    %v88 = vpop.f32.mrf.mxu0
    %v89 = vadd.f32 %v31, %v88
    %90 = vdwg.mxu0
    %91 = vst [vmem:[#allocation2] sm:$0xff] %v73
    %vm92 = vcmask 523264
    %93 = vst.msk [vmem:[#allocation2 + $0x8] sm:$0xff] %vm92, %v87
    %94 = vst [vmem:[#allocation2 + $0x10] sm:$0xff] %v75
    %95 = vst.msk [vmem:[#allocation2 + $0x18] sm:$0xff] %vm92, %v89
    %v96 = vld [vmem:[%s4] sm:$0x1]
    %v98 = vperm.slane %v96, 0
    %v100 = vld [vmem:[%s3] sm:$0xff]
    %v101 = vld [vmem:[%s3 + $0x8] sm:$0xff]
    %v102 = vld [vmem:[%s3 + $0x10] sm:$0xff]
    %v103 = vld [vmem:[%s3 + $0x18] sm:$0xff]
    %v104 = vld [vmem:[%s3 + $0x20] sm:$0xff]
    %v105 = vld [vmem:[%s3 + $0x28] sm:$0xff]
    %v106 = vld [vmem:[%s3 + $0x30] sm:$0xff]
    %v107 = vld [vmem:[%s3 + $0x38] sm:$0xff]
    %v116 = vunpack.c.l.b16 %v100
    %v117 = vunpack.c.h.b16 %v100
    %v118 = vunpack.c.l.b16 %v101
    %v119 = vunpack.c.h.b16 %v101
    %v120 = vunpack.c.l.b16 %v102
    %v121 = vunpack.c.h.b16 %v102
    %v122 = vunpack.c.l.b16 %v103
    %v123 = vunpack.c.h.b16 %v103
    %v124 = vunpack.c.l.b16 %v104
    %v125 = vunpack.c.h.b16 %v104
    %v126 = vunpack.c.l.b16 %v105
    %v127 = vunpack.c.h.b16 %v105
    %v128 = vunpack.c.l.b16 %v106
    %v129 = vunpack.c.h.b16 %v106
    %v130 = vunpack.c.l.b16 %v107
    %v131 = vunpack.c.h.b16 %v107
    %v132 = vpack.c.b16 %v118, %v116
    %v133 = vpack.c.b16 %v119, %v117
    %v134 = vpack.c.b16 %v122, %v120
    %v135 = vpack.c.b16 %v123, %v121
    %v136 = vpack.c.b16 %v126, %v124
    %v137 = vpack.c.b16 %v127, %v125
    %v138 = vpack.c.b16 %v130, %v128
    %v139 = vpack.c.b16 %v131, %v129
    %v149 = vsel %vm92, 0, 0
    %151 = vmatpush.bf16.msra.mxu0 0
    %152 = vmatpush.bf16.msra.mxu0 0
    %153 = vmatpush.bf16.msra.mxu0 0
    %154 = vmatpush.bf16.msra.mxu0 0
    %155 = vmatpush.bf16.msra.mxu0 %v138
    %156 = vmatpush.bf16.msra.mxu0 %v136
    %157 = vmatpush.bf16.msra.mxu0 %v134
    %158 = vmatpush.bf16.msra.mxu0 %v132
    %159 = vmatmul.bf16.gmra.mxu0 %v149
    %v160 = vpop.f32.mrf.mxu0
    %v161 = vadd.f32 0.0, %v160
    %v162 = vpop.f32.mrf.mxu0
    %163 = vdwg.mxu0
    %164 = vmatpush.bf16.msra.mxu0 0
    %165 = vmatpush.bf16.msra.mxu0 0
    %166 = vmatpush.bf16.msra.mxu0 0
    %167 = vmatpush.bf16.msra.mxu0 0
    %168 = vmatpush.bf16.msra.mxu0 %v139
    %169 = vmatpush.bf16.msra.mxu0 %v137
    %170 = vmatpush.bf16.msra.mxu0 %v135
    %171 = vmatpush.bf16.msra.mxu0 %v133
    %172 = vmatmul.bf16.gmra.mxu0 %v149
    %v173 = vpop.f32.mrf.mxu0
    %v174 = vadd.f32 0.0, %v173
    %v175 = vpop.f32.mrf.mxu0
    %176 = vdwg.mxu0
    %v177 = vld [vmem:[#allocation2] sm:$0x3]
    %v178 = vld [vmem:[#allocation2 + $0x8] sm:$0x3]
    %v179 = vadd.f32 %v177, %v161
    %v180 = vxor.u32 %v179, 2147483648
    %v181 = vmul.f32 %v180, 1.442695
    %v182 = vpow.pop %v181
    %v183 = vadd.f32 %v182, 1.0
    %v184 = vrcp.pop %v183
    %v185 = vmul.f32 %v183, %v184
    %v186 = vsub.f32 1.0, %v185
    %v187 = vmul.f32 %v184, %v186
    %v188 = vadd.f32 %v184, %v187
    %vm189 = vweird.f32 %v183
    %vm190 = vweird.f32 %v184
    %vm191 = vmor %vm189, %vm190
    %v192 = vsel %vm191, %v184, %v188
    %v193 = vand.u32 2147483647, %v183
    %vm194 = vcmp.eq.f32.partialorder %v193, 8.507059e+37
    %v195 = vand.u32 %v183, 2147483648
    %v196 = vor.u32 1.1754944e-38, %v195
    %v197 = vsel %vm194, %v196, %v192
    %v198 = vmul.f32 1.0, %v197
    %v199 = vadd.f32 %v174, %v98
    %v200 = vmul.f32 %v198, %v199
    %v201 = vadd.f32 %v178, %v200
    %v202 = vtanh.pop %v201
    %v203 = vsub.f32 0.0, %v202
    %205 = vrot.lane.b32.xlu0 %v203, 64
    %v206 = vpop.permute.xlu0 %205
    %v208 = vmul.f32 %v198, %v206
    %210 = vrot.lane.b32.xlu0 %v208, 64
    %v211 = vpop.permute.xlu0 %210
    %v213 = vadd.f32 %v202, %v211
    %vm214 = vcmask 254976
    %215 = vst.msk [vmem:[#allocation4] sm:$0x3] %vm214, %v213
    %217 = vrot.lane.b32.xlu0 %v213, 96
    %v218 = vpop.permute.xlu0 %217
    %220 = vst.msk [vmem:[#allocation3 + $0xe] sm:$0x3] %vm214, %v218
    %v221 = vpack.c.bf16 %v213, %v213
    %v222 = vld [vmem:[%s3] sm:$0xff]
    %v223 = vld [vmem:[%s3 + $0x8] sm:$0xff]
    %v224 = vld [vmem:[%s3 + $0x10] sm:$0xff]
    %v225 = vld [vmem:[%s3 + $0x18] sm:$0xff]
    %v226 = vld [vmem:[%s3 + $0x20] sm:$0xff]
    %v227 = vld [vmem:[%s3 + $0x28] sm:$0xff]
    %v228 = vld [vmem:[%s3 + $0x30] sm:$0xff]
    %v229 = vld [vmem:[%s3 + $0x38] sm:$0xff]
    %v238 = vunpack.c.l.b16 %v222
    %v239 = vunpack.c.h.b16 %v222
    %v240 = vunpack.c.l.b16 %v223
    %v241 = vunpack.c.h.b16 %v223
    %v242 = vunpack.c.l.b16 %v224
    %v243 = vunpack.c.h.b16 %v224
    %v244 = vunpack.c.l.b16 %v225
    %v245 = vunpack.c.h.b16 %v225
    %v246 = vunpack.c.l.b16 %v226
    %v247 = vunpack.c.h.b16 %v226
    %v248 = vunpack.c.l.b16 %v227
    %v249 = vunpack.c.h.b16 %v227
    %v250 = vunpack.c.l.b16 %v228
    %v251 = vunpack.c.h.b16 %v228
    %v252 = vunpack.c.l.b16 %v229
    %v253 = vunpack.c.h.b16 %v229
    %v254 = vpack.c.b16 %v240, %v238
    %v255 = vpack.c.b16 %v241, %v239
    %v256 = vpack.c.b16 %v244, %v242
    %v257 = vpack.c.b16 %v245, %v243
    %v258 = vpack.c.b16 %v248, %v246
    %v259 = vpack.c.b16 %v249, %v247
    %v260 = vpack.c.b16 %v252, %v250
    %v261 = vpack.c.b16 %v253, %v251
    %v271 = vsel %vm92, %v221, 0
    %273 = vmatpush.bf16.msra.mxu0 0
    %274 = vmatpush.bf16.msra.mxu0 0
    %275 = vmatpush.bf16.msra.mxu0 0
    %276 = vmatpush.bf16.msra.mxu0 0
    %277 = vmatpush.bf16.msra.mxu0 %v260
    %278 = vmatpush.bf16.msra.mxu0 %v258
    %279 = vmatpush.bf16.msra.mxu0 %v256
    %280 = vmatpush.bf16.msra.mxu0 %v254
    %281 = vmatmul.bf16.gmra.mxu0 %v271
    %v282 = vpop.f32.mrf.mxu0
    %v283 = vadd.f32 0.0, %v282
    %v284 = vpop.f32.mrf.mxu0
    %285 = vdwg.mxu0
    %286 = vmatpush.bf16.msra.mxu0 0
    %287 = vmatpush.bf16.msra.mxu0 0
    %288 = vmatpush.bf16.msra.mxu0 0
    %289 = vmatpush.bf16.msra.mxu0 0
    %290 = vmatpush.bf16.msra.mxu0 %v261
    %291 = vmatpush.bf16.msra.mxu0 %v259
    %292 = vmatpush.bf16.msra.mxu0 %v257
    %293 = vmatpush.bf16.msra.mxu0 %v255
    %294 = vmatmul.bf16.gmra.mxu0 %v271
    %v295 = vpop.f32.mrf.mxu0
    %v296 = vadd.f32 0.0, %v295
    %v297 = vpop.f32.mrf.mxu0
    %298 = vdwg.mxu0
    %v299 = vld [vmem:[#allocation2] sm:$0xc]
    %v300 = vld [vmem:[#allocation2 + $0x8] sm:$0xc]
    %v302 = vrot.slane %v283, 6
    %v304 = vadd.f32 %v299, %v302
    %v305 = vxor.u32 %v304, 2147483648
    %v306 = vmul.f32 %v305, 1.442695
    %v307 = vpow.pop %v306
    %v308 = vadd.f32 %v307, 1.0
    %v309 = vrcp.pop %v308
    %v310 = vmul.f32 %v308, %v309
    %v311 = vsub.f32 1.0, %v310
    %v312 = vmul.f32 %v309, %v311
    %v313 = vadd.f32 %v309, %v312
    %vm314 = vweird.f32 %v308
    %vm315 = vweird.f32 %v309
    %vm316 = vmor %vm314, %vm315
    %v317 = vsel %vm316, %v309, %v313
    %v318 = vand.u32 2147483647, %v308
    %vm319 = vcmp.eq.f32.partialorder %v318, 8.507059e+37
    %v320 = vand.u32 %v308, 2147483648
    %v321 = vor.u32 1.1754944e-38, %v320
    %v322 = vsel %vm319, %v321, %v317
    %v323 = vmul.f32 1.0, %v322
    %v324 = vadd.f32 %v296, %v98
    %v326 = vrot.slane %v324, 6
    %v328 = vmul.f32 %v323, %v326
    %v329 = vadd.f32 %v300, %v328
    %v330 = vtanh.pop %v329
    %v332 = vrot.slane %v330, 2
    %v334 = vsub.f32 %v213, %v332
    %v336 = vrot.slane %v334, 6
    %337 = vrot.lane.b32.xlu0 %v336, 64
    %v338 = vpop.permute.xlu0 %337
    %v340 = vmul.f32 %v323, %v338
    %342 = vrot.lane.b32.xlu0 %v340, 64
    %v343 = vpop.permute.xlu0 %342
    %v345 = vadd.f32 %v330, %v343
    %vm346 = vcmask 257026
    %347 = vst.msk [vmem:[#allocation4] sm:$0xc] %vm346, %v345
    %349 = vrot.lane.b32.xlu0 %v345, 96
    %v350 = vpop.permute.xlu0 %349
    %352 = vst.msk [vmem:[#allocation3 + $0xa] sm:$0xc] %vm346, %v350
    %v353 = vpack.c.bf16 %v345, %v345
    %v354 = vld [vmem:[%s3] sm:$0xff]
    %v355 = vld [vmem:[%s3 + $0x8] sm:$0xff]
    %v356 = vld [vmem:[%s3 + $0x10] sm:$0xff]
    %v357 = vld [vmem:[%s3 + $0x18] sm:$0xff]
    %v358 = vld [vmem:[%s3 + $0x20] sm:$0xff]
    %v359 = vld [vmem:[%s3 + $0x28] sm:$0xff]
    %v360 = vld [vmem:[%s3 + $0x30] sm:$0xff]
    %v361 = vld [vmem:[%s3 + $0x38] sm:$0xff]
    %v363 = vrot.slane %v353, 1
    %v372 = vunpack.c.l.b16 %v354
    %v373 = vunpack.c.h.b16 %v354
    %v374 = vunpack.c.l.b16 %v355
    %v375 = vunpack.c.h.b16 %v355
    %v376 = vunpack.c.l.b16 %v356
    %v377 = vunpack.c.h.b16 %v356
    %v378 = vunpack.c.l.b16 %v357
    %v379 = vunpack.c.h.b16 %v357
    %v380 = vunpack.c.l.b16 %v358
    %v381 = vunpack.c.h.b16 %v358
    %v382 = vunpack.c.l.b16 %v359
    %v383 = vunpack.c.h.b16 %v359
    %v384 = vunpack.c.l.b16 %v360
    %v385 = vunpack.c.h.b16 %v360
    %v386 = vunpack.c.l.b16 %v361
    %v387 = vunpack.c.h.b16 %v361
    %v388 = vpack.c.b16 %v374, %v372
    %v389 = vpack.c.b16 %v375, %v373
    %v390 = vpack.c.b16 %v378, %v376
    %v391 = vpack.c.b16 %v379, %v377
    %v392 = vpack.c.b16 %v382, %v380
    %v393 = vpack.c.b16 %v383, %v381
    %v394 = vpack.c.b16 %v386, %v384
    %v395 = vpack.c.b16 %v387, %v385
    %v405 = vsel %vm92, %v363, 0
    %407 = vmatpush.bf16.msra.mxu0 0
    %408 = vmatpush.bf16.msra.mxu0 0
    %409 = vmatpush.bf16.msra.mxu0 0
    %410 = vmatpush.bf16.msra.mxu0 0
    %411 = vmatpush.bf16.msra.mxu0 %v394
    %412 = vmatpush.bf16.msra.mxu0 %v392
    %413 = vmatpush.bf16.msra.mxu0 %v390
    %414 = vmatpush.bf16.msra.mxu0 %v388
    %415 = vmatmul.bf16.gmra.mxu0 %v405
    %v416 = vpop.f32.mrf.mxu0
    %v417 = vadd.f32 0.0, %v416
    %v418 = vpop.f32.mrf.mxu0
    %419 = vdwg.mxu0
    %420 = vmatpush.bf16.msra.mxu0 0
    %421 = vmatpush.bf16.msra.mxu0 0
    %422 = vmatpush.bf16.msra.mxu0 0
    %423 = vmatpush.bf16.msra.mxu0 0
    %424 = vmatpush.bf16.msra.mxu0 %v395
    %425 = vmatpush.bf16.msra.mxu0 %v393
    %426 = vmatpush.bf16.msra.mxu0 %v391
    %427 = vmatpush.bf16.msra.mxu0 %v389
    %428 = vmatmul.bf16.gmra.mxu0 %v405
    %v429 = vpop.f32.mrf.mxu0
    %v430 = vadd.f32 0.0, %v429
    %v431 = vpop.f32.mrf.mxu0
    %432 = vdwg.mxu0
    %v433 = vld [vmem:[#allocation2] sm:$0x30]
    %v434 = vld [vmem:[#allocation2 + $0x8] sm:$0x30]
    %v436 = vrot.slane %v417, 4
    %v438 = vadd.f32 %v433, %v436
    %v439 = vxor.u32 %v438, 2147483648
    %v440 = vmul.f32 %v439, 1.442695
    %v441 = vpow.pop %v440
    %v442 = vadd.f32 %v441, 1.0
    %v443 = vrcp.pop %v442
    %v444 = vmul.f32 %v442, %v443
    %v445 = vsub.f32 1.0, %v444
    %v446 = vmul.f32 %v443, %v445
    %v447 = vadd.f32 %v443, %v446
    %vm448 = vweird.f32 %v442
    %vm449 = vweird.f32 %v443
    %vm450 = vmor %vm448, %vm449
    %v451 = vsel %vm450, %v443, %v447
    %v452 = vand.u32 2147483647, %v442
    %vm453 = vcmp.eq.f32.partialorder %v452, 8.507059e+37
    %v454 = vand.u32 %v442, 2147483648
    %v455 = vor.u32 1.1754944e-38, %v454
    %v456 = vsel %vm453, %v455, %v451
    %v457 = vmul.f32 1.0, %v456
    %v458 = vadd.f32 %v430, %v98
    %v460 = vrot.slane %v458, 4
    %v462 = vmul.f32 %v457, %v460
    %v463 = vadd.f32 %v434, %v462
    %v464 = vtanh.pop %v463
    %v466 = vrot.slane %v464, 2
    %v468 = vsub.f32 %v345, %v466
    %v470 = vrot.slane %v468, 6
    %471 = vrot.lane.b32.xlu0 %v470, 64
    %v472 = vpop.permute.xlu0 %471
    %v474 = vmul.f32 %v457, %v472
    %476 = vrot.lane.b32.xlu0 %v474, 64
    %v477 = vpop.permute.xlu0 %476
    %v479 = vadd.f32 %v464, %v477
    %vm480 = vcmask 259076
    %481 = vst.msk [vmem:[#allocation4] sm:$0x30] %vm480, %v479
    %483 = vrot.lane.b32.xlu0 %v479, 96
    %v484 = vpop.permute.xlu0 %483
    %486 = vst.msk [vmem:[#allocation3 + $0x6] sm:$0x30] %vm480, %v484
    %v487 = vpack.c.bf16 %v479, %v479
    %v488 = vld [vmem:[%s3] sm:$0xff]
    %v489 = vld [vmem:[%s3 + $0x8] sm:$0xff]
    %v490 = vld [vmem:[%s3 + $0x10] sm:$0xff]
    %v491 = vld [vmem:[%s3 + $0x18] sm:$0xff]
    %v492 = vld [vmem:[%s3 + $0x20] sm:$0xff]
    %v493 = vld [vmem:[%s3 + $0x28] sm:$0xff]
    %v494 = vld [vmem:[%s3 + $0x30] sm:$0xff]
    %v495 = vld [vmem:[%s3 + $0x38] sm:$0xff]
    %v497 = vrot.slane %v487, 2
    %v506 = vunpack.c.l.b16 %v488
    %v507 = vunpack.c.h.b16 %v488
    %v508 = vunpack.c.l.b16 %v489
    %v509 = vunpack.c.h.b16 %v489
    %v510 = vunpack.c.l.b16 %v490
    %v511 = vunpack.c.h.b16 %v490
    %v512 = vunpack.c.l.b16 %v491
    %v513 = vunpack.c.h.b16 %v491
    %v514 = vunpack.c.l.b16 %v492
    %v515 = vunpack.c.h.b16 %v492
    %v516 = vunpack.c.l.b16 %v493
    %v517 = vunpack.c.h.b16 %v493
    %v518 = vunpack.c.l.b16 %v494
    %v519 = vunpack.c.h.b16 %v494
    %v520 = vunpack.c.l.b16 %v495
    %v521 = vunpack.c.h.b16 %v495
    %v522 = vpack.c.b16 %v508, %v506
    %v523 = vpack.c.b16 %v509, %v507
    %v524 = vpack.c.b16 %v512, %v510
    %v525 = vpack.c.b16 %v513, %v511
    %v526 = vpack.c.b16 %v516, %v514
    %v527 = vpack.c.b16 %v517, %v515
    %v528 = vpack.c.b16 %v520, %v518
    %v529 = vpack.c.b16 %v521, %v519
    %v539 = vsel %vm92, %v497, 0
    %541 = vmatpush.bf16.msra.mxu0 0
    %542 = vmatpush.bf16.msra.mxu0 0
    %543 = vmatpush.bf16.msra.mxu0 0
    %544 = vmatpush.bf16.msra.mxu0 0
    %545 = vmatpush.bf16.msra.mxu0 %v528
    %546 = vmatpush.bf16.msra.mxu0 %v526
    %547 = vmatpush.bf16.msra.mxu0 %v524
    %548 = vmatpush.bf16.msra.mxu0 %v522
    %549 = vmatmul.bf16.gmra.mxu0 %v539
    %v550 = vpop.f32.mrf.mxu0
    %v551 = vadd.f32 0.0, %v550
    %v552 = vpop.f32.mrf.mxu0
    %553 = vdwg.mxu0
    %554 = vmatpush.bf16.msra.mxu0 0
    %555 = vmatpush.bf16.msra.mxu0 0
    %556 = vmatpush.bf16.msra.mxu0 0
    %557 = vmatpush.bf16.msra.mxu0 0
    %558 = vmatpush.bf16.msra.mxu0 %v529
    %559 = vmatpush.bf16.msra.mxu0 %v527
    %560 = vmatpush.bf16.msra.mxu0 %v525
    %561 = vmatpush.bf16.msra.mxu0 %v523
    %562 = vmatmul.bf16.gmra.mxu0 %v539
    %v563 = vpop.f32.mrf.mxu0
    %v564 = vadd.f32 0.0, %v563
    %v565 = vpop.f32.mrf.mxu0
    %566 = vdwg.mxu0
    %v567 = vld [vmem:[#allocation2] sm:$0xc0]
    %v568 = vld [vmem:[#allocation2 + $0x8] sm:$0xc0]
    %v570 = vrot.slane %v551, 2
    %v572 = vadd.f32 %v567, %v570
    %v573 = vxor.u32 %v572, 2147483648
    %v574 = vmul.f32 %v573, 1.442695
    %v575 = vpow.pop %v574
    %v576 = vadd.f32 %v575, 1.0
    %v577 = vrcp.pop %v576
    %v578 = vmul.f32 %v576, %v577
    %v579 = vsub.f32 1.0, %v578
    %v580 = vmul.f32 %v577, %v579
    %v581 = vadd.f32 %v577, %v580
    %vm582 = vweird.f32 %v576
    %vm583 = vweird.f32 %v577
    %vm584 = vmor %vm582, %vm583
    %v585 = vsel %vm584, %v577, %v581
    %v586 = vand.u32 2147483647, %v576
    %vm587 = vcmp.eq.f32.partialorder %v586, 8.507059e+37
    %v588 = vand.u32 %v576, 2147483648
    %v589 = vor.u32 1.1754944e-38, %v588
    %v590 = vsel %vm587, %v589, %v585
    %v591 = vmul.f32 1.0, %v590
    %v592 = vadd.f32 %v564, %v98
    %v594 = vrot.slane %v592, 2
    %v596 = vmul.f32 %v591, %v594
    %v597 = vadd.f32 %v568, %v596
    %v598 = vtanh.pop %v597
    %v600 = vrot.slane %v598, 2
    %v602 = vsub.f32 %v479, %v600
    %v604 = vrot.slane %v602, 6
    %605 = vrot.lane.b32.xlu0 %v604, 64
    %v606 = vpop.permute.xlu0 %605
    %v608 = vmul.f32 %v591, %v606
    %610 = vrot.lane.b32.xlu0 %v608, 64
    %v611 = vpop.permute.xlu0 %610
    %v613 = vadd.f32 %v598, %v611
    %vm614 = vcmask 261126
    %615 = vst.msk [vmem:[#allocation4] sm:$0xc0] %vm614, %v613
    %617 = vrot.lane.b32.xlu0 %v613, 96
    %v618 = vpop.permute.xlu0 %617
    %620 = vst.msk [vmem:[#allocation3 + $0x2] sm:$0xc0] %vm614, %v618
    %v621 = vpack.c.bf16 %v613, %v613
    %v622 = vld [vmem:[%s3] sm:$0xff]
    %v623 = vld [vmem:[%s3 + $0x8] sm:$0xff]
    %v624 = vld [vmem:[%s3 + $0x10] sm:$0xff]
    %v625 = vld [vmem:[%s3 + $0x18] sm:$0xff]
    %v626 = vld [vmem:[%s3 + $0x20] sm:$0xff]
    %v627 = vld [vmem:[%s3 + $0x28] sm:$0xff]
    %v628 = vld [vmem:[%s3 + $0x30] sm:$0xff]
    %v629 = vld [vmem:[%s3 + $0x38] sm:$0xff]
    %v631 = vrot.slane %v621, 3
    %v640 = vunpack.c.l.b16 %v622
    %v641 = vunpack.c.h.b16 %v622
    %v642 = vunpack.c.l.b16 %v623
    %v643 = vunpack.c.h.b16 %v623
    %v644 = vunpack.c.l.b16 %v624
    %v645 = vunpack.c.h.b16 %v624
    %v646 = vunpack.c.l.b16 %v625
    %v647 = vunpack.c.h.b16 %v625
    %v648 = vunpack.c.l.b16 %v626
    %v649 = vunpack.c.h.b16 %v626
    %v650 = vunpack.c.l.b16 %v627
    %v651 = vunpack.c.h.b16 %v627
    %v652 = vunpack.c.l.b16 %v628
    %v653 = vunpack.c.h.b16 %v628
    %v654 = vunpack.c.l.b16 %v629
    %v655 = vunpack.c.h.b16 %v629
    %v656 = vpack.c.b16 %v642, %v640
    %v657 = vpack.c.b16 %v643, %v641
    %v658 = vpack.c.b16 %v646, %v644
    %v659 = vpack.c.b16 %v647, %v645
    %v660 = vpack.c.b16 %v650, %v648
    %v661 = vpack.c.b16 %v651, %v649
    %v662 = vpack.c.b16 %v654, %v652
    %v663 = vpack.c.b16 %v655, %v653
    %v673 = vsel %vm92, %v631, 0
    %675 = vmatpush.bf16.msra.mxu0 0
    %676 = vmatpush.bf16.msra.mxu0 0
    %677 = vmatpush.bf16.msra.mxu0 0
    %678 = vmatpush.bf16.msra.mxu0 0
    %679 = vmatpush.bf16.msra.mxu0 %v662
    %680 = vmatpush.bf16.msra.mxu0 %v660
    %681 = vmatpush.bf16.msra.mxu0 %v658
    %682 = vmatpush.bf16.msra.mxu0 %v656
    %683 = vmatmul.bf16.gmra.mxu0 %v673
    %v684 = vpop.f32.mrf.mxu0
    %v685 = vadd.f32 0.0, %v684
    %v686 = vpop.f32.mrf.mxu0
    %687 = vdwg.mxu0
    %688 = vmatpush.bf16.msra.mxu0 0
    %689 = vmatpush.bf16.msra.mxu0 0
    %690 = vmatpush.bf16.msra.mxu0 0
    %691 = vmatpush.bf16.msra.mxu0 0
    %692 = vmatpush.bf16.msra.mxu0 %v663
    %693 = vmatpush.bf16.msra.mxu0 %v661
    %694 = vmatpush.bf16.msra.mxu0 %v659
    %695 = vmatpush.bf16.msra.mxu0 %v657
    %696 = vmatmul.bf16.gmra.mxu0 %v673
    %v697 = vpop.f32.mrf.mxu0
    %v698 = vadd.f32 0.0, %v697
    %v699 = vpop.f32.mrf.mxu0
    %700 = vdwg.mxu0
    %v701 = vld [vmem:[#allocation2 + $0x10] sm:$0x3]
    %v702 = vld [vmem:[#allocation2 + $0x18] sm:$0x3]
    %v703 = vadd.f32 %v701, %v685
    %v704 = vxor.u32 %v703, 2147483648
    %v705 = vmul.f32 %v704, 1.442695
    %v706 = vpow.pop %v705
    %v707 = vadd.f32 %v706, 1.0
    %v708 = vrcp.pop %v707
    %v709 = vmul.f32 %v707, %v708
    %v710 = vsub.f32 1.0, %v709
    %v711 = vmul.f32 %v708, %v710
    %v712 = vadd.f32 %v708, %v711
    %vm713 = vweird.f32 %v707
    %vm714 = vweird.f32 %v708
    %vm715 = vmor %vm713, %vm714
    %v716 = vsel %vm715, %v708, %v712
    %v717 = vand.u32 2147483647, %v707
    %vm718 = vcmp.eq.f32.partialorder %v717, 8.507059e+37
    %v719 = vand.u32 %v707, 2147483648
    %v720 = vor.u32 1.1754944e-38, %v719
    %v721 = vsel %vm718, %v720, %v716
    %v722 = vmul.f32 1.0, %v721
    %v723 = vadd.f32 %v698, %v98
    %v724 = vmul.f32 %v722, %v723
    %v725 = vadd.f32 %v702, %v724
    %v726 = vtanh.pop %v725
    %v728 = vrot.slane %v726, 2
    %v730 = vsub.f32 %v613, %v728
    %v732 = vrot.slane %v730, 6
    %733 = vrot.lane.b32.xlu0 %v732, 64
    %v734 = vpop.permute.xlu0 %733
    %v736 = vmul.f32 %v722, %v734
    %738 = vrot.lane.b32.xlu0 %v736, 64
    %v739 = vpop.permute.xlu0 %738
    %v741 = vadd.f32 %v726, %v739
    %742 = vst.msk [vmem:[#allocation4 + $0x8] sm:$0x3] %vm214, %v741
    %744 = vrot.lane.b32.xlu0 %v741, 96
    %v745 = vpop.permute.xlu0 %744
    %747 = vst.msk [vmem:[#allocation3 + $0x6] sm:$0x3] %vm214, %v745
    %v748 = vpack.c.bf16 %v741, %v741
    %v749 = vld [vmem:[%s3] sm:$0xff]
    %v750 = vld [vmem:[%s3 + $0x8] sm:$0xff]
    %v751 = vld [vmem:[%s3 + $0x10] sm:$0xff]
    %v752 = vld [vmem:[%s3 + $0x18] sm:$0xff]
    %v753 = vld [vmem:[%s3 + $0x20] sm:$0xff]
    %v754 = vld [vmem:[%s3 + $0x28] sm:$0xff]
    %v755 = vld [vmem:[%s3 + $0x30] sm:$0xff]
    %v756 = vld [vmem:[%s3 + $0x38] sm:$0xff]
    %v765 = vunpack.c.l.b16 %v749
    %v766 = vunpack.c.h.b16 %v749
    %v767 = vunpack.c.l.b16 %v750
    %v768 = vunpack.c.h.b16 %v750
    %v769 = vunpack.c.l.b16 %v751
    %v770 = vunpack.c.h.b16 %v751
    %v771 = vunpack.c.l.b16 %v752
    %v772 = vunpack.c.h.b16 %v752
    %v773 = vunpack.c.l.b16 %v753
    %v774 = vunpack.c.h.b16 %v753
    %v775 = vunpack.c.l.b16 %v754
    %v776 = vunpack.c.h.b16 %v754
    %v777 = vunpack.c.l.b16 %v755
    %v778 = vunpack.c.h.b16 %v755
    %v779 = vunpack.c.l.b16 %v756
    %v780 = vunpack.c.h.b16 %v756
    %v781 = vpack.c.b16 %v767, %v765
    %v782 = vpack.c.b16 %v768, %v766
    %v783 = vpack.c.b16 %v771, %v769
    %v784 = vpack.c.b16 %v772, %v770
    %v785 = vpack.c.b16 %v775, %v773
    %v786 = vpack.c.b16 %v776, %v774
    %v787 = vpack.c.b16 %v779, %v777
    %v788 = vpack.c.b16 %v780, %v778
    %v798 = vsel %vm92, %v748, 0
    %800 = vmatpush.bf16.msra.mxu0 0
    %801 = vmatpush.bf16.msra.mxu0 0
    %802 = vmatpush.bf16.msra.mxu0 0
    %803 = vmatpush.bf16.msra.mxu0 0
    %804 = vmatpush.bf16.msra.mxu0 %v787
    %805 = vmatpush.bf16.msra.mxu0 %v785
    %806 = vmatpush.bf16.msra.mxu0 %v783
    %807 = vmatpush.bf16.msra.mxu0 %v781
    %808 = vmatmul.bf16.gmra.mxu0 %v798
    %v809 = vpop.f32.mrf.mxu0
    %v810 = vadd.f32 0.0, %v809
    %v811 = vpop.f32.mrf.mxu0
    %812 = vdwg.mxu0
    %813 = vmatpush.bf16.msra.mxu0 0
    %814 = vmatpush.bf16.msra.mxu0 0
    %815 = vmatpush.bf16.msra.mxu0 0
    %816 = vmatpush.bf16.msra.mxu0 0
    %817 = vmatpush.bf16.msra.mxu0 %v788
    %818 = vmatpush.bf16.msra.mxu0 %v786
    %819 = vmatpush.bf16.msra.mxu0 %v784
    %820 = vmatpush.bf16.msra.mxu0 %v782
    %821 = vmatmul.bf16.gmra.mxu0 %v798
    %v822 = vpop.f32.mrf.mxu0
    %v823 = vadd.f32 0.0, %v822
    %v824 = vpop.f32.mrf.mxu0
    %825 = vdwg.mxu0
    %v826 = vld [vmem:[#allocation2 + $0x10] sm:$0xc]
    %v827 = vld [vmem:[#allocation2 + $0x18] sm:$0xc]
    %v829 = vrot.slane %v810, 6
    %v831 = vadd.f32 %v826, %v829
    %v832 = vxor.u32 %v831, 2147483648
    %v833 = vmul.f32 %v832, 1.442695
    %v834 = vpow.pop %v833
    %v835 = vadd.f32 %v834, 1.0
    %v836 = vrcp.pop %v835
    %v837 = vmul.f32 %v835, %v836
    %v838 = vsub.f32 1.0, %v837
    %v839 = vmul.f32 %v836, %v838
    %v840 = vadd.f32 %v836, %v839
    %vm841 = vweird.f32 %v835
    %vm842 = vweird.f32 %v836
    %vm843 = vmor %vm841, %vm842
    %v844 = vsel %vm843, %v836, %v840
    %v845 = vand.u32 2147483647, %v835
    %vm846 = vcmp.eq.f32.partialorder %v845, 8.507059e+37
    %v847 = vand.u32 %v835, 2147483648
    %v848 = vor.u32 1.1754944e-38, %v847
    %v849 = vsel %vm846, %v848, %v844
    %v850 = vmul.f32 1.0, %v849
    %v851 = vadd.f32 %v823, %v98
    %v853 = vrot.slane %v851, 6
    %v855 = vmul.f32 %v850, %v853
    %v856 = vadd.f32 %v827, %v855
    %v857 = vtanh.pop %v856
    %v859 = vrot.slane %v857, 2
    %v861 = vsub.f32 %v741, %v859
    %v863 = vrot.slane %v861, 6
    %864 = vrot.lane.b32.xlu0 %v863, 64
    %v865 = vpop.permute.xlu0 %864
    %v867 = vmul.f32 %v850, %v865
    %869 = vrot.lane.b32.xlu0 %v867, 64
    %v870 = vpop.permute.xlu0 %869
    %v872 = vadd.f32 %v857, %v870
    %873 = vst.msk [vmem:[#allocation4 + $0x8] sm:$0xc] %vm346, %v872
    %875 = vrot.lane.b32.xlu0 %v872, 96
    %v876 = vpop.permute.xlu0 %875
    %878 = vst.msk [vmem:[#allocation3 + $0x2] sm:$0xc] %vm346, %v876
    %v879 = vpack.c.bf16 %v872, %v872
    %v880 = vld [vmem:[%s3] sm:$0xff]
    %v881 = vld [vmem:[%s3 + $0x8] sm:$0xff]
    %v882 = vld [vmem:[%s3 + $0x10] sm:$0xff]
    %v883 = vld [vmem:[%s3 + $0x18] sm:$0xff]
    %v884 = vld [vmem:[%s3 + $0x20] sm:$0xff]
    %v885 = vld [vmem:[%s3 + $0x28] sm:$0xff]
    %v886 = vld [vmem:[%s3 + $0x30] sm:$0xff]
    %v887 = vld [vmem:[%s3 + $0x38] sm:$0xff]
    %v889 = vrot.slane %v879, 1
    %v898 = vunpack.c.l.b16 %v880
    %v899 = vunpack.c.h.b16 %v880
    %v900 = vunpack.c.l.b16 %v881
    %v901 = vunpack.c.h.b16 %v881
    %v902 = vunpack.c.l.b16 %v882
    %v903 = vunpack.c.h.b16 %v882
    %v904 = vunpack.c.l.b16 %v883
    %v905 = vunpack.c.h.b16 %v883
    %v906 = vunpack.c.l.b16 %v884
    %v907 = vunpack.c.h.b16 %v884
    %v908 = vunpack.c.l.b16 %v885
    %v909 = vunpack.c.h.b16 %v885
    %v910 = vunpack.c.l.b16 %v886
    %v911 = vunpack.c.h.b16 %v886
    %v912 = vunpack.c.l.b16 %v887
    %v913 = vunpack.c.h.b16 %v887
    %v914 = vpack.c.b16 %v900, %v898
    %v915 = vpack.c.b16 %v901, %v899
    %v916 = vpack.c.b16 %v904, %v902
    %v917 = vpack.c.b16 %v905, %v903
    %v918 = vpack.c.b16 %v908, %v906
    %v919 = vpack.c.b16 %v909, %v907
    %v920 = vpack.c.b16 %v912, %v910
    %v921 = vpack.c.b16 %v913, %v911
    %v931 = vsel %vm92, %v889, 0
    %933 = vmatpush.bf16.msra.mxu0 0
    %934 = vmatpush.bf16.msra.mxu0 0
    %935 = vmatpush.bf16.msra.mxu0 0
    %936 = vmatpush.bf16.msra.mxu0 0
    %937 = vmatpush.bf16.msra.mxu0 %v920
    %938 = vmatpush.bf16.msra.mxu0 %v918
    %939 = vmatpush.bf16.msra.mxu0 %v916
    %940 = vmatpush.bf16.msra.mxu0 %v914
    %941 = vmatmul.bf16.gmra.mxu0 %v931
    %v942 = vpop.f32.mrf.mxu0
    %v943 = vadd.f32 0.0, %v942
    %v944 = vpop.f32.mrf.mxu0
    %945 = vdwg.mxu0
    %946 = vmatpush.bf16.msra.mxu0 0
    %947 = vmatpush.bf16.msra.mxu0 0
    %948 = vmatpush.bf16.msra.mxu0 0
    %949 = vmatpush.bf16.msra.mxu0 0
    %950 = vmatpush.bf16.msra.mxu0 %v921
    %951 = vmatpush.bf16.msra.mxu0 %v919
    %952 = vmatpush.bf16.msra.mxu0 %v917
    %953 = vmatpush.bf16.msra.mxu0 %v915
    %954 = vmatmul.bf16.gmra.mxu0 %v931
    %v955 = vpop.f32.mrf.mxu0
    %v956 = vadd.f32 0.0, %v955
    %v957 = vpop.f32.mrf.mxu0
    %958 = vdwg.mxu0
    %v959 = vld [vmem:[#allocation2 + $0x10] sm:$0x30]
    %v960 = vld [vmem:[#allocation2 + $0x18] sm:$0x30]
    %v962 = vrot.slane %v943, 4
    %v964 = vadd.f32 %v959, %v962
    %v965 = vxor.u32 %v964, 2147483648
    %v966 = vmul.f32 %v965, 1.442695
    %v967 = vpow.pop %v966
    %v968 = vadd.f32 %v967, 1.0
    %v969 = vrcp.pop %v968
    %v970 = vmul.f32 %v968, %v969
    %v971 = vsub.f32 1.0, %v970
    %v972 = vmul.f32 %v969, %v971
    %v973 = vadd.f32 %v969, %v972
    %vm974 = vweird.f32 %v968
    %vm975 = vweird.f32 %v969
    %vm976 = vmor %vm974, %vm975
    %v977 = vsel %vm976, %v969, %v973
    %v978 = vand.u32 2147483647, %v968
    %vm979 = vcmp.eq.f32.partialorder %v978, 8.507059e+37
    %v980 = vand.u32 %v968, 2147483648
    %v981 = vor.u32 1.1754944e-38, %v980
    %v982 = vsel %vm979, %v981, %v977
    %v983 = vmul.f32 1.0, %v982
    %v984 = vadd.f32 %v956, %v98
    %v986 = vrot.slane %v984, 4
    %v988 = vmul.f32 %v983, %v986
    %v989 = vadd.f32 %v960, %v988
    %v990 = vtanh.pop %v989
    %v992 = vrot.slane %v990, 2
    %v994 = vsub.f32 %v872, %v992
    %v996 = vrot.slane %v994, 6
    %997 = vrot.lane.b32.xlu0 %v996, 64
    %v998 = vpop.permute.xlu0 %997
    %v1000 = vmul.f32 %v983, %v998
    %1002 = vrot.lane.b32.xlu0 %v1000, 64
    %v1003 = vpop.permute.xlu0 %1002
    %v1005 = vadd.f32 %v990, %v1003
    %1006 = vst.msk [vmem:[#allocation4 + $0x8] sm:$0x30] %vm480, %v1005
    %1008 = vrot.lane.b32.xlu0 %v1005, 96
    %v1009 = vpop.permute.xlu0 %1008
    %1011 = vst.msk [vmem:[#allocation3 - $0x2] sm:$0x30] %vm480, %v1009
    %v1012 = vpack.c.bf16 %v1005, %v1005
    %v1013 = vld [vmem:[%s3] sm:$0xff]
    %v1014 = vld [vmem:[%s3 + $0x8] sm:$0xff]
    %v1015 = vld [vmem:[%s3 + $0x10] sm:$0xff]
    %v1016 = vld [vmem:[%s3 + $0x18] sm:$0xff]
    %v1017 = vld [vmem:[%s3 + $0x20] sm:$0xff]
    %v1018 = vld [vmem:[%s3 + $0x28] sm:$0xff]
    %v1019 = vld [vmem:[%s3 + $0x30] sm:$0xff]
    %v1020 = vld [vmem:[%s3 + $0x38] sm:$0xff]
    %v1022 = vrot.slane %v1012, 2
    %v1031 = vunpack.c.l.b16 %v1013
    %v1032 = vunpack.c.h.b16 %v1013
    %v1033 = vunpack.c.l.b16 %v1014
    %v1034 = vunpack.c.h.b16 %v1014
    %v1035 = vunpack.c.l.b16 %v1015
    %v1036 = vunpack.c.h.b16 %v1015
    %v1037 = vunpack.c.l.b16 %v1016
    %v1038 = vunpack.c.h.b16 %v1016
    %v1039 = vunpack.c.l.b16 %v1017
    %v1040 = vunpack.c.h.b16 %v1017
    %v1041 = vunpack.c.l.b16 %v1018
    %v1042 = vunpack.c.h.b16 %v1018
    %v1043 = vunpack.c.l.b16 %v1019
    %v1044 = vunpack.c.h.b16 %v1019
    %v1045 = vunpack.c.l.b16 %v1020
    %v1046 = vunpack.c.h.b16 %v1020
    %v1047 = vpack.c.b16 %v1033, %v1031
    %v1048 = vpack.c.b16 %v1034, %v1032
    %v1049 = vpack.c.b16 %v1037, %v1035
    %v1050 = vpack.c.b16 %v1038, %v1036
    %v1051 = vpack.c.b16 %v1041, %v1039
    %v1052 = vpack.c.b16 %v1042, %v1040
    %v1053 = vpack.c.b16 %v1045, %v1043
    %v1054 = vpack.c.b16 %v1046, %v1044
    %v1064 = vsel %vm92, %v1022, 0
    %1066 = vmatpush.bf16.msra.mxu0 0
    %1067 = vmatpush.bf16.msra.mxu0 0
    %1068 = vmatpush.bf16.msra.mxu0 0
    %1069 = vmatpush.bf16.msra.mxu0 0
    %1070 = vmatpush.bf16.msra.mxu0 %v1053
    %1071 = vmatpush.bf16.msra.mxu0 %v1051
    %1072 = vmatpush.bf16.msra.mxu0 %v1049
    %1073 = vmatpush.bf16.msra.mxu0 %v1047
    %1074 = vmatmul.bf16.gmra.mxu0 %v1064
    %v1075 = vpop.f32.mrf.mxu0
    %v1076 = vadd.f32 0.0, %v1075
    %v1077 = vpop.f32.mrf.mxu0
    %1078 = vdwg.mxu0
    %1079 = vmatpush.bf16.msra.mxu0 0
    %1080 = vmatpush.bf16.msra.mxu0 0
    %1081 = vmatpush.bf16.msra.mxu0 0
    %1082 = vmatpush.bf16.msra.mxu0 0
    %1083 = vmatpush.bf16.msra.mxu0 %v1054
    %1084 = vmatpush.bf16.msra.mxu0 %v1052
    %1085 = vmatpush.bf16.msra.mxu0 %v1050
    %1086 = vmatpush.bf16.msra.mxu0 %v1048
    %1087 = vmatmul.bf16.gmra.mxu0 %v1064
    %v1088 = vpop.f32.mrf.mxu0
    %v1089 = vadd.f32 0.0, %v1088
    %v1090 = vpop.f32.mrf.mxu0
    %1091 = vdwg.mxu0
    %v1092 = vld [vmem:[#allocation2 + $0x10] sm:$0xc0]
    %v1093 = vld [vmem:[#allocation2 + $0x18] sm:$0xc0]
    %v1095 = vrot.slane %v1076, 2
    %v1097 = vadd.f32 %v1092, %v1095
    %v1098 = vxor.u32 %v1097, 2147483648
    %v1099 = vmul.f32 %v1098, 1.442695
    %v1100 = vpow.pop %v1099
    %v1101 = vadd.f32 %v1100, 1.0
    %v1102 = vrcp.pop %v1101
    %v1103 = vmul.f32 %v1101, %v1102
    %v1104 = vsub.f32 1.0, %v1103
    %v1105 = vmul.f32 %v1102, %v1104
    %v1106 = vadd.f32 %v1102, %v1105
    %vm1107 = vweird.f32 %v1101
    %vm1108 = vweird.f32 %v1102
    %vm1109 = vmor %vm1107, %vm1108
    %v1110 = vsel %vm1109, %v1102, %v1106
    %v1111 = vand.u32 2147483647, %v1101
    %vm1112 = vcmp.eq.f32.partialorder %v1111, 8.507059e+37
    %v1113 = vand.u32 %v1101, 2147483648
    %v1114 = vor.u32 1.1754944e-38, %v1113
    %v1115 = vsel %vm1112, %v1114, %v1110
    %v1116 = vmul.f32 1.0, %v1115
    %v1117 = vadd.f32 %v1089, %v98
    %v1119 = vrot.slane %v1117, 2
    %v1121 = vmul.f32 %v1116, %v1119
    %v1122 = vadd.f32 %v1093, %v1121
    %v1123 = vtanh.pop %v1122
    %v1125 = vrot.slane %v1123, 2
    %v1127 = vsub.f32 %v1005, %v1125
    %v1129 = vrot.slane %v1127, 6
    %1130 = vrot.lane.b32.xlu0 %v1129, 64
    %v1131 = vpop.permute.xlu0 %1130
    %v1133 = vmul.f32 %v1116, %v1131
    %1135 = vrot.lane.b32.xlu0 %v1133, 64
    %v1136 = vpop.permute.xlu0 %1135
    %v1138 = vadd.f32 %v1123, %v1136
    %1139 = vst.msk [vmem:[#allocation4 + $0x8] sm:$0xc0] %vm614, %v1138
    %1141 = vrot.lane.b32.xlu0 %v1138, 96
    %v1142 = vpop.permute.xlu0 %1141
    %1144 = vst.msk [vmem:[#allocation3 - $0x6] sm:$0xc0] %vm614, %v1142
    %v1145 = vld [vmem:[#allocation3] sm:$0xff]
    %v1146 = vld [vmem:[#allocation3 + $0x8] sm:$0xff]
    %1149 = vrot.lane.b32.xlu0 %v1145, 32
    %v1150 = vpop.permute.xlu0 %1149
    %1151 = vrot.lane.b32.xlu0 %v1146, 32
    %v1152 = vpop.permute.xlu0 %1151
    %vm1155 = vcmask 523520
    %1156 = vst.msk [vmem:[#allocation4] sm:$0xff] %vm1155, %v1150
    %1157 = vst.msk [vmem:[#allocation4 + $0x8] sm:$0xff] %vm1155, %v1152
    // Predicated region
    $region22: #{bigru_encode.1} parent=1 // pred_check
      _
    $region23: #{bigru_encode.1} parent=1 // pred_check_branch
      %1159 = sbr.rel (0) target = $region25
    $region24: #{bigru_encode.1} parent=1 // pred_region
      %1161 = vsyncadd [#allocation5], 0
      %s1162 = sshll.u32 [#allocation4], 4
      %s1163 = int_to_ptr.vmem [resolvable:$true] %s1162
      %s1164 = sshll.u32 %s5, 4
      %s1165 = int_to_ptr.hbm [resolvable:$true] %s1164
      %1170 = dma.vmem_to_hbm [thread:$0]  %s1163, 256, %s1165, [#allocation5], 128, 128, 8
    $region25: #{bigru_encode.1} parent=1 // pred_fallthru
      _
    // Predicated region
    $region26: #{bigru_encode.1} parent=1 // pred_check
      _
    $region27: #{bigru_encode.1} parent=1 // pred_check_branch
      %1172 = sbr.rel (0) target = $region29
    $region28: #{bigru_encode.1} parent=1 // pred_region
      %1174 = dma.done [#allocation5], 256
    $region29: #{bigru_encode.1} parent=1 // pred_fallthru
      _
    %1175 = vsyncpa [#allocation5], 1

</llo_original>
